<compile_context>
chip_gen: v6e
topology: v6e:2x2x1
jax: 0.10.0
libtpu: 0.0.40
codegen_flags: <defaults>
</compile_context>

<pallas_src>
import functools
import math

import jax
import jax.numpy as jnp
from jax.experimental import pallas as pl
from jax.experimental.pallas import tpu as pltpu


# ---------------------------------------------------------------------------
# Kernel helpers
# ---------------------------------------------------------------------------
def _layer_norm(x, w, b, eps=1e-5):
    # x: (L, E), w/b: (1, E)
    mu = jnp.mean(x, axis=-1, keepdims=True)
    var = jnp.mean((x - mu) ** 2, axis=-1, keepdims=True)
    return (x - mu) * jax.lax.rsqrt(var + eps) * w + b


def _gelu_exact(x):
    # matches torch.nn.GELU() (erf-based)
    return 0.5 * x * (1.0 + jax.lax.erf(x * (1.0 / math.sqrt(2.0))))


# ---------------------------------------------------------------------------
# Kernel: one grid step == one batch element (full fused block)
# ---------------------------------------------------------------------------
def _block_kernel(
    q_ref, k_ref, v_ref,          # (Lq,E), (Lk,E), (Lk,E) activations
    pslab_ref,                    # (8, P) packed small parameters (f32)
    wattn_ref,                    # (4E, E) packed [Wq^T*s; Wk^T; Wv^T; Wo^T]
    wfc_ref,                      # (E, 4E)
    wproj_ref,                    # (4E, E)
    out_ref,                      # (Lq, E)
    *, d_model: int, n_head: int, head_dim: int, matmul_dtype,
):
    f32 = jnp.float32
    E, H, Dh = d_model, n_head, head_dim

    q2 = q_ref[...].astype(f32)                       # (Lq, E)
    k2 = k_ref[...].astype(f32)                       # (Lk, E)
    v2 = v_ref[...].astype(f32)                       # (Lk, E)

    # --- unpack the single small-parameter slab (static slices) -------------
    pslab = pslab_ref[...]
    ln1_w, ln1_b = pslab[0:1, :E], pslab[1:2, :E]
    ln2_w, ln2_b = pslab[2:3, :E], pslab[3:4, :E]
    bo, bproj = pslab[4:5, :E], pslab[5:6, :E]
    bq = pslab[6:7, 0:E]                              # already * 1/sqrt(Dh)
    bk = pslab[6:7, E:2 * E]
    bv = pslab[6:7, 2 * E:3 * E]
    bfc = pslab[7:8, 0:4 * E]

    wattn = wattn_ref[...]                            # (4E, E) in matmul dtype
    wqT, wkT = wattn[0:E, :], wattn[E:2 * E, :]
    wvT, woT = wattn[2 * E:3 * E, :], wattn[3 * E:4 * E, :]

    # --- ln_1 (shared params) + dense Q/K/V projections ----------------------
    qn = _layer_norm(q2, ln1_w, ln1_b).astype(matmul_dtype)
    kn = _layer_norm(k2, ln1_w, ln1_b).astype(matmul_dtype)
    vn = _layer_norm(v2, ln1_w, ln1_b).astype(matmul_dtype)

    Q = jnp.dot(qn, wqT, preferred_element_type=f32) + bq    # (Lq, E)  (scaled)
    K = jnp.dot(kn, wkT, preferred_element_type=f32) + bk    # (Lk, E)
    V = jnp.dot(vn, wvT, preferred_element_type=f32) + bv    # (Lk, E)

    # --- head split: static lane slices stacked on a new leading axis --------
    def split_heads(x):                               # (L, E) -> (H, L, Dh)
        return jnp.stack([x[:, h * Dh:(h + 1) * Dh] for h in range(H)], axis=0)

    Qh = split_heads(Q).astype(matmul_dtype)
    Kh = split_heads(K).astype(matmul_dtype)
    Vh = split_heads(V).astype(matmul_dtype)

    # --- attention (head-leading batched contractions), softmax in f32 -------
    s = jnp.einsum("hqd,hkd->hqk", Qh, Kh, preferred_element_type=f32)
    s = s - jnp.max(s, axis=-1, keepdims=True)
    p = jnp.exp(s)
    p = p * pl.reciprocal(jnp.sum(p, axis=-1, keepdims=True), approx=False)

    ctx = jnp.einsum("hqk,hkd->hqd", p.astype(matmul_dtype), Vh,
                     preferred_element_type=f32)      # (H, Lq, Dh)

    # --- merge heads along lanes -> single output-projection matmul ----------
    ctx_cat = jnp.concatenate([ctx[h] for h in range(H)], axis=-1)   # (Lq, E)
    attn_out = jnp.dot(ctx_cat.astype(matmul_dtype), woT,
                       preferred_element_type=f32) + bo

    # first residual
    x = q2 + attn_out

    # --- MLP branch: ln_2 -> c_fc -> GELU -> c_proj --------------------------
    xn = _layer_norm(x, ln2_w, ln2_b).astype(matmul_dtype)
    hmid = jnp.dot(xn, wfc_ref[...], preferred_element_type=f32) + bfc
    hmid = _gelu_exact(hmid)
    mlp_out = jnp.dot(hmid.astype(matmul_dtype), wproj_ref[...],
                      preferred_element_type=f32) + bproj

    out_ref[...] = (x + mlp_out).astype(out_ref.dtype)


# ---------------------------------------------------------------------------
# Wrapper
# ---------------------------------------------------------------------------
def residual_cross_attention_block(q, k, v, params, n_head: int,
                                   matmul_dtype=jnp.float32):
    """q: (N, Lq, E), k/v: (N, Lk, E). Returns (N, Lq, E).

    matmul_dtype: jnp.float32 (exact, default) or jnp.bfloat16 on v6e/v7x for
    MXU-native matmuls (elementwise/softmax math stays f32 either way).
    """
    N, Lq, E = q.shape
    _, Lk, _ = k.shape
    H = n_head
    Dh = E // H
    assert H * Dh == E
    scale = 1.0 / math.sqrt(Dh)

    # PyTorch packed in_proj: rows [0:E]=q, [E:2E]=k, [2E:3E]=v
    wq, wk, wv = jnp.split(params["in_proj_w"], 3, axis=0)   # each (E, E)
    bq, bk, bv = jnp.split(params["in_proj_b"], 3, axis=0)   # each (E,)

    # Pack the four (E, E) attention matrices into one slab; fold the softmax
    # scale into the query projection (weights AND bias), as PyTorch does.
    w_attn = jnp.concatenate(
        [wq.T * scale, wk.T, wv.T, params["out_proj_w"].T], axis=0
    ).astype(matmul_dtype)                                    # (4E, E)
    wfc_T = params["fc_w"].T.astype(matmul_dtype)             # (E, 4E)
    wproj_T = params["proj_w"].T.astype(matmul_dtype)         # (4E, E)

    # One lane-padded slab for all tiny parameter vectors -> single DMA.
    P = ((4 * E + 127) // 128) * 128
    pslab = jnp.zeros((8, P), jnp.float32)
    pslab = pslab.at[0, :E].set(params["ln1_w"])
    pslab = pslab.at[1, :E].set(params["ln1_b"])
    pslab = pslab.at[2, :E].set(params["ln2_w"])
    pslab = pslab.at[3, :E].set(params["ln2_b"])
    pslab = pslab.at[4, :E].set(params["out_proj_b"])
    pslab = pslab.at[5, :E].set(params["proj_b"])
    pslab = pslab.at[6, :E].set(bq * scale)
    pslab = pslab.at[6, E:2 * E].set(bk)
    pslab = pslab.at[6, 2 * E:3 * E].set(bv)
    pslab = pslab.at[7, :4 * E].set(params["fc_b"])

    q2 = q.reshape(N * Lq, E)
    k2 = k.reshape(N * Lk, E)
    v2 = v.reshape(N * Lk, E)

    kernel = functools.partial(_block_kernel, d_model=E, n_head=H, head_dim=Dh,
                               matmul_dtype=matmul_dtype)

    out2 = pl.pallas_call(
        kernel,
        out_shape=jax.ShapeDtypeStruct((N * Lq, E), q.dtype),
        grid_spec=pltpu.PrefetchScalarGridSpec(
            num_scalar_prefetch=0,
            grid=(N,),                       # one batch element per step
            in_specs=[
                pl.BlockSpec((Lq, E), lambda i: (i, 0)),       # q rows, batch i
                pl.BlockSpec((Lk, E), lambda i: (i, 0)),       # k rows, batch i
                pl.BlockSpec((Lk, E), lambda i: (i, 0)),       # v rows, batch i
                pl.BlockSpec((8, P), lambda i: (0, 0)),        # packed vectors
                pl.BlockSpec((4 * E, E), lambda i: (0, 0)),    # qkv/out weights
                pl.BlockSpec((E, 4 * E), lambda i: (0, 0)),    # c_fc weight
                pl.BlockSpec((4 * E, E), lambda i: (0, 0)),    # c_proj weight
            ],
            out_specs=pl.BlockSpec((Lq, E), lambda i: (i, 0)),
        ),
        compiler_params=pltpu.CompilerParams(
            # batch axis is independent -> shard across v7x's two TensorCores
            dimension_semantics=("parallel",),
        ),
    )(q2, k2, v2, pslab, w_attn, wfc_T, wproj_T)

    return out2.reshape(N, Lq, E)


# ---------------------------------------------------------------------------
# Pure-JAX reference (mirrors PyTorch semantics) for verification
# ---------------------------------------------------------------------------
def reference_forward(q, k, v, params, n_head: int):
    N, Lq, E = q.shape
    _, Lk, _ = k.shape
    Dh = E // n_head

    def ln(x, w, b, eps=1e-5):
        mu = jnp.mean(x, axis=-1, keepdims=True)
        var = jnp.mean((x - mu) ** 2, axis=-1, keepdims=True)
        return (x - mu) * jax.lax.rsqrt(var + eps) * w + b

    wq, wk, wv = jnp.split(params["in_proj_w"], 3, axis=0)
    bq, bk, bv = jnp.split(params["in_proj_b"], 3, axis=0)

    qn = ln(q, params["ln1_w"], params["ln1_b"])
    kn = ln(k, params["ln1_w"], params["ln1_b"])
    vn = ln(v, params["ln1_w"], params["ln1_b"])

    Q = qn @ wq.T + bq
    K = kn @ wk.T + bk
    V = vn @ wv.T + bv

    Qh = Q.reshape(N, Lq, n_head, Dh)
    Kh = K.reshape(N, Lk, n_head, Dh)
    Vh = V.reshape(N, Lk, n_head, Dh)

    scores = jnp.einsum("nlhd,nmhd->nhlm", Qh, Kh) / math.sqrt(Dh)
    p = jax.nn.softmax(scores, axis=-1)
    ctx = jnp.einsum("nhlm,nmhd->nlhd", p, Vh).reshape(N, Lq, E)
    ctx = ctx @ params["out_proj_w"].T + params["out_proj_b"]

    x = q + ctx
    xn = ln(x, params["ln2_w"], params["ln2_b"])
    h = xn @ params["fc_w"].T + params["fc_b"]
    h = 0.5 * h * (1.0 + jax.lax.erf(h / math.sqrt(2.0)))
    return x + (h @ params["proj_w"].T + params["proj_b"])


# ---------------------------------------------------------------------------
# Main
# ---------------------------------------------------------------------------
if __name__ == "__main__":
    d_model = 32
    n_head = 4
    N = 2        # batch
    Lq = 8       # query sequence length
    Lk = 16      # key/value sequence length

    key = jax.random.PRNGKey(0)
    keys = jax.random.split(key, 16)

    def nrm(k, shape, scale=0.05):
        return jax.random.normal(k, shape, dtype=jnp.float32) * scale

    params = {
        "ln1_w": jnp.ones((d_model,), jnp.float32) + nrm(keys[0], (d_model,)),
        "ln1_b": nrm(keys[1], (d_model,)),
        "in_proj_w": nrm(keys[2], (3 * d_model, d_model)),
        "in_proj_b": nrm(keys[3], (3 * d_model,)),
        "out_proj_w": nrm(keys[4], (d_model, d_model)),
        "out_proj_b": nrm(keys[5], (d_model,)),
        "ln2_w": jnp.ones((d_model,), jnp.float32) + nrm(keys[6], (d_model,)),
        "ln2_b": nrm(keys[7], (d_model,)),
        "fc_w": nrm(keys[8], (4 * d_model, d_model)),
        "fc_b": nrm(keys[9], (4 * d_model,)),
        "proj_w": nrm(keys[10], (d_model, 4 * d_model)),
        "proj_b": nrm(keys[11], (d_model,)),
    }

    q = jax.random.normal(keys[12], (N, Lq, d_model), dtype=jnp.float32)
    k = jax.random.normal(keys[13], (N, Lk, d_model), dtype=jnp.float32)
    v = jax.random.normal(keys[14], (N, Lk, d_model), dtype=jnp.float32)

    out = residual_cross_attention_block(q, k, v, params, n_head)
    out = jax.block_until_ready(out)

    ref = jax.block_until_ready(reference_forward(q, k, v, params, n_head))

    assert out.shape == (N, Lq, d_model)
    assert jnp.allclose(out, ref, rtol=1e-4, atol=2e-5), (
        f"max abs err = {jnp.max(jnp.abs(out - ref))}"
    )
    print("KERNEL_OK")
</pallas_src>

<mosaic_0001>
module attributes {stable_mosaic.version = 11 : i64} {
  func.func @_block_kernel(%arg0: i32, %arg1: memref<8x32xf32, #tpu.memory_space<vmem>>, %arg2: memref<16x32xf32, #tpu.memory_space<vmem>>, %arg3: memref<16x32xf32, #tpu.memory_space<vmem>>, %arg4: memref<8x128xf32, #tpu.memory_space<vmem>>, %arg5: memref<128x32xf32, #tpu.memory_space<vmem>>, %arg6: memref<32x128xf32, #tpu.memory_space<vmem>>, %arg7: memref<128x32xf32, #tpu.memory_space<vmem>>, %arg8: memref<8x32xf32, #tpu.memory_space<vmem>>) attributes {dimension_semantics = [#tpu.dimension_semantics<parallel>], iteration_bounds = array<i64: 2>, scalar_prefetch = 0 : i64, scratch_operands = 0 : i64, tpu.core_type = #tpu.core_type<tc>, window_params = [{transform_indices = @transform_0, window_bounds = array<i64: 8, 32>}, {transform_indices = @transform_1, window_bounds = array<i64: 16, 32>}, {transform_indices = @transform_2, window_bounds = array<i64: 16, 32>}, {pipeline_mode = #tpu.pipeline_mode<synchronous>, transform_indices = @transform_3, window_bounds = array<i64: 8, 128>}, {pipeline_mode = #tpu.pipeline_mode<synchronous>, transform_indices = @transform_4, window_bounds = array<i64: 128, 32>}, {pipeline_mode = #tpu.pipeline_mode<synchronous>, transform_indices = @transform_5, window_bounds = array<i64: 32, 128>}, {pipeline_mode = #tpu.pipeline_mode<synchronous>, transform_indices = @transform_6, window_bounds = array<i64: 128, 32>}, {transform_indices = @transform_7, window_bounds = array<i64: 8, 32>}]} {
    %c0 = arith.constant 0 : index
    %c0_0 = arith.constant 0 : index
    %0 = vector.load %arg1[%c0, %c0_0] : memref<8x32xf32, #tpu.memory_space<vmem>>, vector<8x32xf32>
    %c0_1 = arith.constant 0 : index
    %c0_2 = arith.constant 0 : index
    %1 = vector.load %arg2[%c0_1, %c0_2] : memref<16x32xf32, #tpu.memory_space<vmem>>, vector<16x32xf32>
    %c0_3 = arith.constant 0 : index
    %c0_4 = arith.constant 0 : index
    %2 = vector.load %arg3[%c0_3, %c0_4] : memref<16x32xf32, #tpu.memory_space<vmem>>, vector<16x32xf32>
    %c0_5 = arith.constant 0 : index
    %c0_6 = arith.constant 0 : index
    %3 = vector.load %arg4[%c0_5, %c0_6] : memref<8x128xf32, #tpu.memory_space<vmem>>, vector<8x128xf32>
    %4 = vector.extract_strided_slice %3 {offsets = [0, 0], sizes = [1, 32], strides = [1, 1]} : vector<8x128xf32> to vector<1x32xf32>
    %5 = vector.extract_strided_slice %3 {offsets = [1, 0], sizes = [1, 32], strides = [1, 1]} : vector<8x128xf32> to vector<1x32xf32>
    %6 = vector.extract_strided_slice %3 {offsets = [2, 0], sizes = [1, 32], strides = [1, 1]} : vector<8x128xf32> to vector<1x32xf32>
    %7 = vector.extract_strided_slice %3 {offsets = [3, 0], sizes = [1, 32], strides = [1, 1]} : vector<8x128xf32> to vector<1x32xf32>
    %8 = vector.extract_strided_slice %3 {offsets = [4, 0], sizes = [1, 32], strides = [1, 1]} : vector<8x128xf32> to vector<1x32xf32>
    %9 = vector.extract_strided_slice %3 {offsets = [5, 0], sizes = [1, 32], strides = [1, 1]} : vector<8x128xf32> to vector<1x32xf32>
    %10 = vector.extract_strided_slice %3 {offsets = [6, 0], sizes = [1, 32], strides = [1, 1]} : vector<8x128xf32> to vector<1x32xf32>
    %11 = vector.extract_strided_slice %3 {offsets = [6, 32], sizes = [1, 32], strides = [1, 1]} : vector<8x128xf32> to vector<1x32xf32>
    %12 = vector.extract_strided_slice %3 {offsets = [6, 64], sizes = [1, 32], strides = [1, 1]} : vector<8x128xf32> to vector<1x32xf32>
    %13 = vector.extract_strided_slice %3 {offsets = [7, 0], sizes = [1, 128], strides = [1, 1]} : vector<8x128xf32> to vector<1x128xf32>
    %c0_7 = arith.constant 0 : index
    %c0_8 = arith.constant 0 : index
    %14 = vector.load %arg5[%c0_7, %c0_8] : memref<128x32xf32, #tpu.memory_space<vmem>>, vector<128x32xf32>
    %15 = vector.extract_strided_slice %14 {offsets = [0, 0], sizes = [32, 32], strides = [1, 1]} : vector<128x32xf32> to vector<32x32xf32>
    %16 = vector.extract_strided_slice %14 {offsets = [32, 0], sizes = [32, 32], strides = [1, 1]} : vector<128x32xf32> to vector<32x32xf32>
    %17 = vector.extract_strided_slice %14 {offsets = [64, 0], sizes = [32, 32], strides = [1, 1]} : vector<128x32xf32> to vector<32x32xf32>
    %18 = vector.extract_strided_slice %14 {offsets = [96, 0], sizes = [32, 32], strides = [1, 1]} : vector<128x32xf32> to vector<32x32xf32>
    %cst = arith.constant dense<0.000000e+00> : vector<8xf32>
    %19 = vector.multi_reduction <add>, %0, %cst [1] : vector<8x32xf32> to vector<8xf32>
    %20 = vector.shape_cast %19 : vector<8xf32> to vector<8x1xf32>
    %cst_9 = arith.constant 3.200000e+01 : f32
    %21 = vector.broadcast %cst_9 : f32 to vector<8x1xf32>
    %22 = arith.divf %20, %21 : vector<8x1xf32>
    %23 = vector.broadcast %22 : vector<8x1xf32> to vector<8x32xf32>
    %24 = arith.subf %0, %23 : vector<8x32xf32>
    %25 = arith.mulf %24, %24 : vector<8x32xf32>
    %cst_10 = arith.constant dense<0.000000e+00> : vector<8xf32>
    %26 = vector.multi_reduction <add>, %25, %cst_10 [1] : vector<8x32xf32> to vector<8xf32>
    %27 = vector.shape_cast %26 : vector<8xf32> to vector<8x1xf32>
    %cst_11 = arith.constant 3.200000e+01 : f32
    %28 = vector.broadcast %cst_11 : f32 to vector<8x1xf32>
    %29 = arith.divf %27, %28 : vector<8x1xf32>
    %30 = vector.broadcast %22 : vector<8x1xf32> to vector<8x32xf32>
    %31 = arith.subf %0, %30 : vector<8x32xf32>
    %cst_12 = arith.constant 9.99999974E-6 : f32
    %32 = vector.broadcast %cst_12 : f32 to vector<8x1xf32>
    %33 = arith.addf %29, %32 : vector<8x1xf32>
    %34 = math.rsqrt %33 : vector<8x1xf32>
    %35 = vector.broadcast %34 : vector<8x1xf32> to vector<8x32xf32>
    %36 = arith.mulf %31, %35 : vector<8x32xf32>
    %37 = vector.broadcast %4 : vector<1x32xf32> to vector<8x32xf32>
    %38 = arith.mulf %36, %37 : vector<8x32xf32>
    %39 = vector.broadcast %5 : vector<1x32xf32> to vector<8x32xf32>
    %40 = arith.addf %38, %39 : vector<8x32xf32>
    %cst_13 = arith.constant dense<0.000000e+00> : vector<16xf32>
    %41 = vector.multi_reduction <add>, %1, %cst_13 [1] : vector<16x32xf32> to vector<16xf32>
    %42 = vector.shape_cast %41 : vector<16xf32> to vector<16x1xf32>
    %cst_14 = arith.constant 3.200000e+01 : f32
    %43 = vector.broadcast %cst_14 : f32 to vector<16x1xf32>
    %44 = arith.divf %42, %43 : vector<16x1xf32>
    %45 = vector.broadcast %44 : vector<16x1xf32> to vector<16x32xf32>
    %46 = arith.subf %1, %45 : vector<16x32xf32>
    %47 = arith.mulf %46, %46 : vector<16x32xf32>
    %cst_15 = arith.constant dense<0.000000e+00> : vector<16xf32>
    %48 = vector.multi_reduction <add>, %47, %cst_15 [1] : vector<16x32xf32> to vector<16xf32>
    %49 = vector.shape_cast %48 : vector<16xf32> to vector<16x1xf32>
    %cst_16 = arith.constant 3.200000e+01 : f32
    %50 = vector.broadcast %cst_16 : f32 to vector<16x1xf32>
    %51 = arith.divf %49, %50 : vector<16x1xf32>
    %52 = vector.broadcast %44 : vector<16x1xf32> to vector<16x32xf32>
    %53 = arith.subf %1, %52 : vector<16x32xf32>
    %cst_17 = arith.constant 9.99999974E-6 : f32
    %54 = vector.broadcast %cst_17 : f32 to vector<16x1xf32>
    %55 = arith.addf %51, %54 : vector<16x1xf32>
    %56 = math.rsqrt %55 : vector<16x1xf32>
    %57 = vector.broadcast %56 : vector<16x1xf32> to vector<16x32xf32>
    %58 = arith.mulf %53, %57 : vector<16x32xf32>
    %59 = vector.broadcast %4 : vector<1x32xf32> to vector<16x32xf32>
    %60 = arith.mulf %58, %59 : vector<16x32xf32>
    %61 = vector.broadcast %5 : vector<1x32xf32> to vector<16x32xf32>
    %62 = arith.addf %60, %61 : vector<16x32xf32>
    %cst_18 = arith.constant dense<0.000000e+00> : vector<16xf32>
    %63 = vector.multi_reduction <add>, %2, %cst_18 [1] : vector<16x32xf32> to vector<16xf32>
    %64 = vector.shape_cast %63 : vector<16xf32> to vector<16x1xf32>
    %cst_19 = arith.constant 3.200000e+01 : f32
    %65 = vector.broadcast %cst_19 : f32 to vector<16x1xf32>
    %66 = arith.divf %64, %65 : vector<16x1xf32>
    %67 = vector.broadcast %66 : vector<16x1xf32> to vector<16x32xf32>
    %68 = arith.subf %2, %67 : vector<16x32xf32>
    %69 = arith.mulf %68, %68 : vector<16x32xf32>
    %cst_20 = arith.constant dense<0.000000e+00> : vector<16xf32>
    %70 = vector.multi_reduction <add>, %69, %cst_20 [1] : vector<16x32xf32> to vector<16xf32>
    %71 = vector.shape_cast %70 : vector<16xf32> to vector<16x1xf32>
    %cst_21 = arith.constant 3.200000e+01 : f32
    %72 = vector.broadcast %cst_21 : f32 to vector<16x1xf32>
    %73 = arith.divf %71, %72 : vector<16x1xf32>
    %74 = vector.broadcast %66 : vector<16x1xf32> to vector<16x32xf32>
    %75 = arith.subf %2, %74 : vector<16x32xf32>
    %cst_22 = arith.constant 9.99999974E-6 : f32
    %76 = vector.broadcast %cst_22 : f32 to vector<16x1xf32>
    %77 = arith.addf %73, %76 : vector<16x1xf32>
    %78 = math.rsqrt %77 : vector<16x1xf32>
    %79 = vector.broadcast %78 : vector<16x1xf32> to vector<16x32xf32>
    %80 = arith.mulf %75, %79 : vector<16x32xf32>
    %81 = vector.broadcast %4 : vector<1x32xf32> to vector<16x32xf32>
    %82 = arith.mulf %80, %81 : vector<16x32xf32>
    %83 = vector.broadcast %5 : vector<1x32xf32> to vector<16x32xf32>
    %84 = arith.addf %82, %83 : vector<16x32xf32>
    %cst_23 = arith.constant dense<0.000000e+00> : vector<8x32xf32>
    %85 = tpu.matmul %40, %15, %cst_23 {dimension_numbers = #tpu.dot_dimension_numbers<[1], [0], [0], [1], [0, 0, 1, 1], [], []>} : vector<8x32xf32>, vector<32x32xf32>, vector<8x32xf32> -> vector<8x32xf32>
    %86 = vector.broadcast %10 : vector<1x32xf32> to vector<8x32xf32>
    %87 = arith.addf %85, %86 : vector<8x32xf32>
    %cst_24 = arith.constant dense<0.000000e+00> : vector<16x32xf32>
    %88 = tpu.matmul %62, %16, %cst_24 {dimension_numbers = #tpu.dot_dimension_numbers<[1], [0], [0], [1], [0, 0, 1, 1], [], []>} : vector<16x32xf32>, vector<32x32xf32>, vector<16x32xf32> -> vector<16x32xf32>
    %89 = vector.broadcast %11 : vector<1x32xf32> to vector<16x32xf32>
    %90 = arith.addf %88, %89 : vector<16x32xf32>
    %cst_25 = arith.constant dense<0.000000e+00> : vector<16x32xf32>
    %91 = tpu.matmul %84, %17, %cst_25 {dimension_numbers = #tpu.dot_dimension_numbers<[1], [0], [0], [1], [0, 0, 1, 1], [], []>} : vector<16x32xf32>, vector<32x32xf32>, vector<16x32xf32> -> vector<16x32xf32>
    %92 = vector.broadcast %12 : vector<1x32xf32> to vector<16x32xf32>
    %93 = arith.addf %91, %92 : vector<16x32xf32>
    %94 = vector.extract_strided_slice %87 {offsets = [0, 0], sizes = [8, 8], strides = [1, 1]} : vector<8x32xf32> to vector<8x8xf32>
    %95 = vector.extract_strided_slice %87 {offsets = [0, 8], sizes = [8, 8], strides = [1, 1]} : vector<8x32xf32> to vector<8x8xf32>
    %96 = vector.extract_strided_slice %87 {offsets = [0, 16], sizes = [8, 8], strides = [1, 1]} : vector<8x32xf32> to vector<8x8xf32>
    %97 = vector.extract_strided_slice %87 {offsets = [0, 24], sizes = [8, 8], strides = [1, 1]} : vector<8x32xf32> to vector<8x8xf32>
    %98 = vector.shape_cast %94 : vector<8x8xf32> to vector<1x8x8xf32>
    %99 = vector.shape_cast %95 : vector<8x8xf32> to vector<1x8x8xf32>
    %100 = vector.shape_cast %96 : vector<8x8xf32> to vector<1x8x8xf32>
    %101 = vector.shape_cast %97 : vector<8x8xf32> to vector<1x8x8xf32>
    %102 = tpu.concatenate %98, %99, %100, %101 in 0 : vector<1x8x8xf32>, vector<1x8x8xf32>, vector<1x8x8xf32>, vector<1x8x8xf32> -> vector<4x8x8xf32>
    %103 = vector.extract_strided_slice %90 {offsets = [0, 0], sizes = [16, 8], strides = [1, 1]} : vector<16x32xf32> to vector<16x8xf32>
    %104 = vector.extract_strided_slice %90 {offsets = [0, 8], sizes = [16, 8], strides = [1, 1]} : vector<16x32xf32> to vector<16x8xf32>
    %105 = vector.extract_strided_slice %90 {offsets = [0, 16], sizes = [16, 8], strides = [1, 1]} : vector<16x32xf32> to vector<16x8xf32>
    %106 = vector.extract_strided_slice %90 {offsets = [0, 24], sizes = [16, 8], strides = [1, 1]} : vector<16x32xf32> to vector<16x8xf32>
    %107 = vector.shape_cast %103 : vector<16x8xf32> to vector<1x16x8xf32>
    %108 = vector.shape_cast %104 : vector<16x8xf32> to vector<1x16x8xf32>
    %109 = vector.shape_cast %105 : vector<16x8xf32> to vector<1x16x8xf32>
    %110 = vector.shape_cast %106 : vector<16x8xf32> to vector<1x16x8xf32>
    %111 = tpu.concatenate %107, %108, %109, %110 in 0 : vector<1x16x8xf32>, vector<1x16x8xf32>, vector<1x16x8xf32>, vector<1x16x8xf32> -> vector<4x16x8xf32>
    %112 = vector.extract_strided_slice %93 {offsets = [0, 0], sizes = [16, 8], strides = [1, 1]} : vector<16x32xf32> to vector<16x8xf32>
    %113 = vector.extract_strided_slice %93 {offsets = [0, 8], sizes = [16, 8], strides = [1, 1]} : vector<16x32xf32> to vector<16x8xf32>
    %114 = vector.extract_strided_slice %93 {offsets = [0, 16], sizes = [16, 8], strides = [1, 1]} : vector<16x32xf32> to vector<16x8xf32>
    %115 = vector.extract_strided_slice %93 {offsets = [0, 24], sizes = [16, 8], strides = [1, 1]} : vector<16x32xf32> to vector<16x8xf32>
    %116 = vector.shape_cast %112 : vector<16x8xf32> to vector<1x16x8xf32>
    %117 = vector.shape_cast %113 : vector<16x8xf32> to vector<1x16x8xf32>
    %118 = vector.shape_cast %114 : vector<16x8xf32> to vector<1x16x8xf32>
    %119 = vector.shape_cast %115 : vector<16x8xf32> to vector<1x16x8xf32>
    %120 = tpu.concatenate %116, %117, %118, %119 in 0 : vector<1x16x8xf32>, vector<1x16x8xf32>, vector<1x16x8xf32>, vector<1x16x8xf32> -> vector<4x16x8xf32>
    "tpu.trace_start"() <{level = 10 : i32, message = "hqd,hkd->hqk"}> : () -> ()
    %cst_26 = arith.constant dense<0.000000e+00> : vector<4x8x16xf32>
    %121 = tpu.matmul %102, %111, %cst_26 {dimension_numbers = #tpu.dot_dimension_numbers<[2], [2], [1], [1], [0, 0, 0, 1, 1, 1], [0], [0]>} : vector<4x8x8xf32>, vector<4x16x8xf32>, vector<4x8x16xf32> -> vector<4x8x16xf32>
    "tpu.trace_stop"() : () -> ()
    %cst_27 = arith.constant dense<0xFF800000> : vector<4x8xf32>
    %122 = vector.multi_reduction <maximumf>, %121, %cst_27 [2] : vector<4x8x16xf32> to vector<4x8xf32>
    %123 = vector.shape_cast %122 : vector<4x8xf32> to vector<4x8x1xf32>
    %124 = vector.broadcast %123 : vector<4x8x1xf32> to vector<4x8x16xf32>
    %125 = arith.subf %121, %124 : vector<4x8x16xf32>
    %126 = math.exp %125 : vector<4x8x16xf32>
    %cst_28 = arith.constant dense<0.000000e+00> : vector<4x8xf32>
    %127 = vector.multi_reduction <add>, %126, %cst_28 [2] : vector<4x8x16xf32> to vector<4x8xf32>
    %128 = vector.shape_cast %127 : vector<4x8xf32> to vector<4x8x1xf32>
    %129 = tpu.reciprocal %128 : vector<4x8x1xf32> -> vector<4x8x1xf32>
    %130 = vector.broadcast %129 : vector<4x8x1xf32> to vector<4x8x16xf32>
    %131 = arith.mulf %126, %130 : vector<4x8x16xf32>
    "tpu.trace_start"() <{level = 10 : i32, message = "hqk,hkd->hqd"}> : () -> ()
    %cst_29 = arith.constant dense<0.000000e+00> : vector<4x8x8xf32>
    %132 = tpu.matmul %131, %120, %cst_29 {dimension_numbers = #tpu.dot_dimension_numbers<[2], [1], [1], [2], [0, 0, 0, 1, 1, 2], [0], [0]>} : vector<4x8x16xf32>, vector<4x16x8xf32>, vector<4x8x8xf32> -> vector<4x8x8xf32>
    "tpu.trace_stop"() : () -> ()
    %133 = vector.extract_strided_slice %132 {offsets = [0, 0, 0], sizes = [1, 8, 8], strides = [1, 1, 1]} : vector<4x8x8xf32> to vector<1x8x8xf32>
    %134 = vector.shape_cast %133 : vector<1x8x8xf32> to vector<8x8xf32>
    %135 = vector.extract_strided_slice %132 {offsets = [1, 0, 0], sizes = [1, 8, 8], strides = [1, 1, 1]} : vector<4x8x8xf32> to vector<1x8x8xf32>
    %136 = vector.shape_cast %135 : vector<1x8x8xf32> to vector<8x8xf32>
    %137 = vector.extract_strided_slice %132 {offsets = [2, 0, 0], sizes = [1, 8, 8], strides = [1, 1, 1]} : vector<4x8x8xf32> to vector<1x8x8xf32>
    %138 = vector.shape_cast %137 : vector<1x8x8xf32> to vector<8x8xf32>
    %139 = vector.extract_strided_slice %132 {offsets = [3, 0, 0], sizes = [1, 8, 8], strides = [1, 1, 1]} : vector<4x8x8xf32> to vector<1x8x8xf32>
    %140 = vector.shape_cast %139 : vector<1x8x8xf32> to vector<8x8xf32>
    %141 = tpu.concatenate %134, %136, %138, %140 in 1 : vector<8x8xf32>, vector<8x8xf32>, vector<8x8xf32>, vector<8x8xf32> -> vector<8x32xf32>
    %cst_30 = arith.constant dense<0.000000e+00> : vector<8x32xf32>
    %142 = tpu.matmul %141, %18, %cst_30 {dimension_numbers = #tpu.dot_dimension_numbers<[1], [0], [0], [1], [0, 0, 1, 1], [], []>} : vector<8x32xf32>, vector<32x32xf32>, vector<8x32xf32> -> vector<8x32xf32>
    %143 = vector.broadcast %8 : vector<1x32xf32> to vector<8x32xf32>
    %144 = arith.addf %142, %143 : vector<8x32xf32>
    %145 = arith.addf %0, %144 : vector<8x32xf32>
    %cst_31 = arith.constant dense<0.000000e+00> : vector<8xf32>
    %146 = vector.multi_reduction <add>, %145, %cst_31 [1] : vector<8x32xf32> to vector<8xf32>
    %147 = vector.shape_cast %146 : vector<8xf32> to vector<8x1xf32>
    %cst_32 = arith.constant 3.200000e+01 : f32
    %148 = vector.broadcast %cst_32 : f32 to vector<8x1xf32>
    %149 = arith.divf %147, %148 : vector<8x1xf32>
    %150 = vector.broadcast %149 : vector<8x1xf32> to vector<8x32xf32>
    %151 = arith.subf %145, %150 : vector<8x32xf32>
    %152 = arith.mulf %151, %151 : vector<8x32xf32>
    %cst_33 = arith.constant dense<0.000000e+00> : vector<8xf32>
    %153 = vector.multi_reduction <add>, %152, %cst_33 [1] : vector<8x32xf32> to vector<8xf32>
    %154 = vector.shape_cast %153 : vector<8xf32> to vector<8x1xf32>
    %cst_34 = arith.constant 3.200000e+01 : f32
    %155 = vector.broadcast %cst_34 : f32 to vector<8x1xf32>
    %156 = arith.divf %154, %155 : vector<8x1xf32>
    %157 = vector.broadcast %149 : vector<8x1xf32> to vector<8x32xf32>
    %158 = arith.subf %145, %157 : vector<8x32xf32>
    %cst_35 = arith.constant 9.99999974E-6 : f32
    %159 = vector.broadcast %cst_35 : f32 to vector<8x1xf32>
    %160 = arith.addf %156, %159 : vector<8x1xf32>
    %161 = math.rsqrt %160 : vector<8x1xf32>
    %162 = vector.broadcast %161 : vector<8x1xf32> to vector<8x32xf32>
    %163 = arith.mulf %158, %162 : vector<8x32xf32>
    %164 = vector.broadcast %6 : vector<1x32xf32> to vector<8x32xf32>
    %165 = arith.mulf %163, %164 : vector<8x32xf32>
    %166 = vector.broadcast %7 : vector<1x32xf32> to vector<8x32xf32>
    %167 = arith.addf %165, %166 : vector<8x32xf32>
    %c0_36 = arith.constant 0 : index
    %c0_37 = arith.constant 0 : index
    %168 = vector.load %arg6[%c0_36, %c0_37] : memref<32x128xf32, #tpu.memory_space<vmem>>, vector<32x128xf32>
    %cst_38 = arith.constant dense<0.000000e+00> : vector<8x128xf32>
    %169 = tpu.matmul %167, %168, %cst_38 {dimension_numbers = #tpu.dot_dimension_numbers<[1], [0], [0], [1], [0, 0, 1, 1], [], []>} : vector<8x32xf32>, vector<32x128xf32>, vector<8x128xf32> -> vector<8x128xf32>
    %170 = vector.broadcast %13 : vector<1x128xf32> to vector<8x128xf32>
    %171 = arith.addf %169, %170 : vector<8x128xf32>
    %cst_39 = arith.constant 5.000000e-01 : f32
    %172 = vector.broadcast %cst_39 : f32 to vector<8x128xf32>
    %173 = arith.mulf %172, %171 : vector<8x128xf32>
    %cst_40 = arith.constant 0.707106769 : f32
    %174 = vector.broadcast %cst_40 : f32 to vector<8x128xf32>
    %175 = arith.mulf %171, %174 : vector<8x128xf32>
    %176 = math.erf %175 : vector<8x128xf32>
    %cst_41 = arith.constant 1.000000e+00 : f32
    %177 = vector.broadcast %cst_41 : f32 to vector<8x128xf32>
    %178 = arith.addf %177, %176 : vector<8x128xf32>
    %179 = arith.mulf %173, %178 : vector<8x128xf32>
    %c0_42 = arith.constant 0 : index
    %c0_43 = arith.constant 0 : index
    %180 = vector.load %arg7[%c0_42, %c0_43] : memref<128x32xf32, #tpu.memory_space<vmem>>, vector<128x32xf32>
    %cst_44 = arith.constant dense<0.000000e+00> : vector<8x32xf32>
    %181 = tpu.matmul %179, %180, %cst_44 {dimension_numbers = #tpu.dot_dimension_numbers<[1], [0], [0], [1], [0, 0, 1, 1], [], []>} : vector<8x128xf32>, vector<128x32xf32>, vector<8x32xf32> -> vector<8x32xf32>
    %182 = vector.broadcast %9 : vector<1x32xf32> to vector<8x32xf32>
    %183 = arith.addf %181, %182 : vector<8x32xf32>
    %184 = arith.addf %145, %183 : vector<8x32xf32>
    %c0_45 = arith.constant 0 : index
    %c0_46 = arith.constant 0 : index
    %185 = vector.load %arg8[%c0_45, %c0_46] : memref<8x32xf32, #tpu.memory_space<vmem>>, vector<8x32xf32>
    tpu.vector_store %arg8[%c0_45, %c0_46], %184 {strides = array<i32>} : memref<8x32xf32, #tpu.memory_space<vmem>>, vector<8x32xf32>,
    return
  }
  func.func @transform_0(%arg0: i32) -> (i32, i32) {
    %c0_i32 = arith.constant 0 : i32
    %c0_i32_0 = arith.constant 0 : i32
    return %arg0, %c0_i32 : i32, i32
  }
  func.func @transform_1(%arg0: i32) -> (i32, i32) {
    %c0_i32 = arith.constant 0 : i32
    %c0_i32_0 = arith.constant 0 : i32
    return %arg0, %c0_i32 : i32, i32
  }
  func.func @transform_2(%arg0: i32) -> (i32, i32) {
    %c0_i32 = arith.constant 0 : i32
    %c0_i32_0 = arith.constant 0 : i32
    return %arg0, %c0_i32 : i32, i32
  }
  func.func @transform_3(%arg0: i32) -> (i32, i32) {
    %c0_i32 = arith.constant 0 : i32
    %c0_i32_0 = arith.constant 0 : i32
    %c0_i32_1 = arith.constant 0 : i32
    return %c0_i32, %c0_i32_0 : i32, i32
  }
  func.func @transform_4(%arg0: i32) -> (i32, i32) {
    %c0_i32 = arith.constant 0 : i32
    %c0_i32_0 = arith.constant 0 : i32
    %c0_i32_1 = arith.constant 0 : i32
    return %c0_i32, %c0_i32_0 : i32, i32
  }
  func.func @transform_5(%arg0: i32) -> (i32, i32) {
    %c0_i32 = arith.constant 0 : i32
    %c0_i32_0 = arith.constant 0 : i32
    %c0_i32_1 = arith.constant 0 : i32
    return %c0_i32, %c0_i32_0 : i32, i32
  }
  func.func @transform_6(%arg0: i32) -> (i32, i32) {
    %c0_i32 = arith.constant 0 : i32
    %c0_i32_0 = arith.constant 0 : i32
    %c0_i32_1 = arith.constant 0 : i32
    return %c0_i32, %c0_i32_0 : i32, i32
  }
  func.func @transform_7(%arg0: i32) -> (i32, i32) {
    %c0_i32 = arith.constant 0 : i32
    %c0_i32_0 = arith.constant 0 : i32
    return %arg0, %c0_i32 : i32, i32
  }
}

</mosaic_0001>

<llo_original>
// kernel: tpu_custom_call.1
$region0: #{tpu_custom_call.1}
  #allocation0 [shape = 'u32[]', space=smem, size = 0x4, offset = 0x4, fixed_abs, tag = 'smem constant byte address 0x4 - core index']
  #allocation1 [shape = 'u32[144,128]{1,0:T(1,128)}', space=vmem, size = 0x12000, scoped, tag = 'internal scratch']
  %s0 = inlined_call_operand.vmem [shape: f32[16,32], index: 0, kind: input, shape index: {}]
  %s1 = inlined_call_operand.vmem [shape: f32[32,32], index: 1, kind: input, shape index: {}]
  %s2 = inlined_call_operand.vmem [shape: f32[32,32], index: 2, kind: input, shape index: {}]
  %s3 = inlined_call_operand.vmem [shape: f32[8,128], index: 3, kind: input, shape index: {}]
  %s4 = inlined_call_operand.vmem [shape: f32[128,32], index: 4, kind: input, shape index: {}]
  %s5 = inlined_call_operand.vmem [shape: f32[32,128], index: 5, kind: input, shape index: {}]
  %s6 = inlined_call_operand.vmem [shape: f32[128,32], index: 6, kind: input, shape index: {}]
  %s7 = inlined_call_operand.hbm [shape: f32[16,32], index: 7, kind: output, shape index: {}]
  %s8 = sld [smem:[#allocation0]]
  $region61: #{tpu_custom_call.1} parent=0
    _
  %s10 = ssub.s32 1, %s8
  %s11 = scalar_select 0, %s10, %s8
  $region1: #{tpu_custom_call.1} parent=0
    #allocation2 [shape = 'u8[8192]{0}', space=vmem, size = 0x2000, scoped, tag = 'output window, operand 0']
    #allocation3 [shape = 's32[2]{0}', space=sflag, size = 0x8, scoped, tag = 'scoped memory for tpu_custom_call.1']
    %12 = vsyncpa [#allocation3], 0
    %s13 = scalar_lea.sflag [#allocation3], 1
    %14 = vsyncpa %s13, 0
    loop: start=0, step=1, limit=4
    $region2: #{tpu_custom_call.1} parent=1 // loop_pre_header
      _
    $region3: #{tpu_custom_call.1} parent=1 // loop_header
      %s16 = sphi 0, %s20
      %p17 = scmp.ge.s32.totalorder %s16, 4
      %s26 = sphi 0, %s28
      %s29 = sphi 0, %s26
      %s30 = sphi 0, %s29
      %s46 = sphi 0, %s30
      %s52 = sphi 0, %s54
      %s55 = sphi 0, %s52
      %s56 = sphi 0, %s55
      %s72 = sphi 0, %s56
      %s78 = sphi 0, %s80
      %s81 = sphi 0, %s78
      %s82 = sphi 0, %s81
      %s98 = sphi 0, %s82
      %s102 = sphi 0, %s102
      %s104 = sphi 0, %s102
      %s105 = sphi 0, %s104
      %s119 = sphi 0, %s105
      %s123 = sphi 0, %s123
      %s125 = sphi 0, %s123
      %s126 = sphi 0, %s125
      %s140 = sphi 0, %s126
      %s144 = sphi 0, %s144
      %s146 = sphi 0, %s144
      %s147 = sphi 0, %s146
      %s161 = sphi 0, %s147
      %s165 = sphi 0, %s165
      %s167 = sphi 0, %s165
      %s168 = sphi 0, %s167
      %s182 = sphi 0, %s168
      %s188 = sphi 0, %s190
      %s191 = sphi 0, %s188
      %s192 = sphi 0, %s191
      %s208 = sphi 0, %s192
    $region4: #{tpu_custom_call.1} parent=1 // loop_header_branch
      %19 = sbr.rel (%p17) target = $region8
    $region5: #{tpu_custom_call.1} parent=1 // loop_body
      %s21 = ssub.s32 %s16, 1
      %s22 = ssub.s32 %s16, 2
      %s23 = sadd.s32 %s16, 1
      %s24 = ssub.s32 %s16, %s23
      %p25 = scmp.eq.s32.totalorder %s24, 0
      %s27 = sadd.s32 %s26, 1
      %s28 = scalar_select %p25, %s26, %s27
      %p31 = pneg %p25
      %p32 = scmp.eq.s32.totalorder %s16, 1
      %p33 = por %p31, %p32
      %p34 = scmp.ne.s32.totalorder %s26, %s29
      %p35 = scmp.eq.s32.totalorder %s16, 0
      %p36 = por %p34, %p35
      %p37 = scmp.ne.s32.totalorder %s26, %s29
      %p38 = scmp.eq.s32.totalorder %s21, 1
      %p39 = por %p37, %p38
      %p40 = scmp.ne.s32.totalorder %s29, %s30
      %p41 = scmp.eq.s32.totalorder %s21, 0
      %p42 = por %p40, %p41
      %p43 = scmp.ne.s32.totalorder %s29, %s30
      %p44 = scmp.eq.s32.totalorder %s22, 1
      %p45 = por %p43, %p44
      %p47 = scmp.ne.s32.totalorder %s30, %s46
      %p48 = scmp.eq.s32.totalorder %s22, 0
      %p49 = por %p47, %p48
      %s50 = ssub.s32 %s16, %s23
      %p51 = scmp.eq.s32.totalorder %s50, 0
      %s53 = sadd.s32 %s52, 1
      %s54 = scalar_select %p51, %s52, %s53
      %p57 = pneg %p51
      %p58 = scmp.eq.s32.totalorder %s16, 1
      %p59 = por %p57, %p58
      %p60 = scmp.ne.s32.totalorder %s52, %s55
      %p61 = scmp.eq.s32.totalorder %s16, 0
      %p62 = por %p60, %p61
      %p63 = scmp.ne.s32.totalorder %s52, %s55
      %p64 = scmp.eq.s32.totalorder %s21, 1
      %p65 = por %p63, %p64
      %p66 = scmp.ne.s32.totalorder %s55, %s56
      %p67 = scmp.eq.s32.totalorder %s21, 0
      %p68 = por %p66, %p67
      %p69 = scmp.ne.s32.totalorder %s55, %s56
      %p70 = scmp.eq.s32.totalorder %s22, 1
      %p71 = por %p69, %p70
      %p73 = scmp.ne.s32.totalorder %s56, %s72
      %p74 = scmp.eq.s32.totalorder %s22, 0
      %p75 = por %p73, %p74
      %s76 = ssub.s32 %s16, %s23
      %p77 = scmp.eq.s32.totalorder %s76, 0
      %s79 = sadd.s32 %s78, 1
      %s80 = scalar_select %p77, %s78, %s79
      %p83 = pneg %p77
      %p84 = scmp.eq.s32.totalorder %s16, 1
      %p85 = por %p83, %p84
      %p86 = scmp.ne.s32.totalorder %s78, %s81
      %p87 = scmp.eq.s32.totalorder %s16, 0
      %p88 = por %p86, %p87
      %p89 = scmp.ne.s32.totalorder %s78, %s81
      %p90 = scmp.eq.s32.totalorder %s21, 1
      %p91 = por %p89, %p90
      %p92 = scmp.ne.s32.totalorder %s81, %s82
      %p93 = scmp.eq.s32.totalorder %s21, 0
      %p94 = por %p92, %p93
      %p95 = scmp.ne.s32.totalorder %s81, %s82
      %p96 = scmp.eq.s32.totalorder %s22, 1
      %p97 = por %p95, %p96
      %p99 = scmp.ne.s32.totalorder %s82, %s98
      %p100 = scmp.eq.s32.totalorder %s22, 0
      %p101 = por %p99, %p100
      %s103 = sadd.s32 %s102, 1
      %p106 = scmp.eq.s32.totalorder %s16, 1
      %p107 = scmp.ne.s32.totalorder %s102, %s104
      %p108 = scmp.eq.s32.totalorder %s16, 0
      %p109 = por %p107, %p108
      %p110 = scmp.ne.s32.totalorder %s102, %s104
      %p111 = scmp.eq.s32.totalorder %s21, 1
      %p112 = por %p110, %p111
      %p113 = scmp.ne.s32.totalorder %s104, %s105
      %p114 = scmp.eq.s32.totalorder %s21, 0
      %p115 = por %p113, %p114
      %p116 = scmp.ne.s32.totalorder %s104, %s105
      %p117 = scmp.eq.s32.totalorder %s22, 1
      %p118 = por %p116, %p117
      %p120 = scmp.ne.s32.totalorder %s105, %s119
      %p121 = scmp.eq.s32.totalorder %s22, 0
      %p122 = por %p120, %p121
      %s124 = sadd.s32 %s123, 1
      %p127 = scmp.eq.s32.totalorder %s16, 1
      %p128 = scmp.ne.s32.totalorder %s123, %s125
      %p129 = scmp.eq.s32.totalorder %s16, 0
      %p130 = por %p128, %p129
      %p131 = scmp.ne.s32.totalorder %s123, %s125
      %p132 = scmp.eq.s32.totalorder %s21, 1
      %p133 = por %p131, %p132
      %p134 = scmp.ne.s32.totalorder %s125, %s126
      %p135 = scmp.eq.s32.totalorder %s21, 0
      %p136 = por %p134, %p135
      %p137 = scmp.ne.s32.totalorder %s125, %s126
      %p138 = scmp.eq.s32.totalorder %s22, 1
      %p139 = por %p137, %p138
      %p141 = scmp.ne.s32.totalorder %s126, %s140
      %p142 = scmp.eq.s32.totalorder %s22, 0
      %p143 = por %p141, %p142
      %s145 = sadd.s32 %s144, 1
      %p148 = scmp.eq.s32.totalorder %s16, 1
      %p149 = scmp.ne.s32.totalorder %s144, %s146
      %p150 = scmp.eq.s32.totalorder %s16, 0
      %p151 = por %p149, %p150
      %p152 = scmp.ne.s32.totalorder %s144, %s146
      %p153 = scmp.eq.s32.totalorder %s21, 1
      %p154 = por %p152, %p153
      %p155 = scmp.ne.s32.totalorder %s146, %s147
      %p156 = scmp.eq.s32.totalorder %s21, 0
      %p157 = por %p155, %p156
      %p158 = scmp.ne.s32.totalorder %s146, %s147
      %p159 = scmp.eq.s32.totalorder %s22, 1
      %p160 = por %p158, %p159
      %p162 = scmp.ne.s32.totalorder %s147, %s161
      %p163 = scmp.eq.s32.totalorder %s22, 0
      %p164 = por %p162, %p163
      %s166 = sadd.s32 %s165, 1
      %p169 = scmp.eq.s32.totalorder %s16, 1
      %p170 = scmp.ne.s32.totalorder %s165, %s167
      %p171 = scmp.eq.s32.totalorder %s16, 0
      %p172 = por %p170, %p171
      %p173 = scmp.ne.s32.totalorder %s165, %s167
      %p174 = scmp.eq.s32.totalorder %s21, 1
      %p175 = por %p173, %p174
      %p176 = scmp.ne.s32.totalorder %s167, %s168
      %p177 = scmp.eq.s32.totalorder %s21, 0
      %p178 = por %p176, %p177
      %p179 = scmp.ne.s32.totalorder %s167, %s168
      %p180 = scmp.eq.s32.totalorder %s22, 1
      %p181 = por %p179, %p180
      %p183 = scmp.ne.s32.totalorder %s168, %s182
      %p184 = scmp.eq.s32.totalorder %s22, 0
      %p185 = por %p183, %p184
      %s186 = ssub.s32 %s16, %s23
      %p187 = scmp.eq.s32.totalorder %s186, 0
      %s189 = sadd.s32 %s188, 1
      %s190 = scalar_select %p187, %s188, %s189
      %p193 = pneg %p187
      %p194 = scmp.eq.s32.totalorder %s16, 1
      %p195 = por %p193, %p194
      %p196 = scmp.ne.s32.totalorder %s188, %s191
      %p197 = scmp.eq.s32.totalorder %s16, 0
      %p198 = por %p196, %p197
      %p199 = scmp.ne.s32.totalorder %s188, %s191
      %p200 = scmp.eq.s32.totalorder %s21, 1
      %p201 = por %p199, %p200
      %p202 = scmp.ne.s32.totalorder %s191, %s192
      %p203 = scmp.eq.s32.totalorder %s21, 0
      %p204 = por %p202, %p203
      %p205 = scmp.ne.s32.totalorder %s191, %s192
      %p206 = scmp.eq.s32.totalorder %s22, 1
      %p207 = por %p205, %p206
      %p209 = scmp.ne.s32.totalorder %s192, %s208
      %p210 = scmp.eq.s32.totalorder %s22, 0
      %p211 = por %p209, %p210
      %p212 = scmp.le.s32.totalorder 1, %s16
      %p213 = scmp.lt.s32.totalorder %s16, 3
      %p214 = pnand %p212, %p213
      %p215 = pneg %p214
      // Predicated region
      $region9: #{tpu_custom_call.1} parent=5 // pred_check
        _
      $region10: #{tpu_custom_call.1} parent=5 // pred_check_branch
        %217 = sbr.rel (%p214) target = $region12
      $region11: #{tpu_custom_call.1} parent=5 // pred_region
        %s218 = ssub.s32 %s16, 1
        // Predicated region
        $region13: #{tpu_custom_call.1} parent=11 // pred_check
          %p219 = pneg %p115
        $region14: #{tpu_custom_call.1} parent=11 // pred_check_branch
          %221 = sbr.rel (%p219) target = $region16
        $region15: #{tpu_custom_call.1} parent=11 // pred_region
          _
        $region16: #{tpu_custom_call.1} parent=11 // pred_fallthru
          _
        // Predicated region
        $region17: #{tpu_custom_call.1} parent=11 // pred_check
          %p222 = pneg %p136
        $region18: #{tpu_custom_call.1} parent=11 // pred_check_branch
          %224 = sbr.rel (%p222) target = $region20
        $region19: #{tpu_custom_call.1} parent=11 // pred_region
          _
        $region20: #{tpu_custom_call.1} parent=11 // pred_fallthru
          _
        // Predicated region
        $region21: #{tpu_custom_call.1} parent=11 // pred_check
          %p225 = pneg %p157
        $region22: #{tpu_custom_call.1} parent=11 // pred_check_branch
          %227 = sbr.rel (%p225) target = $region24
        $region23: #{tpu_custom_call.1} parent=11 // pred_region
          _
        $region24: #{tpu_custom_call.1} parent=11 // pred_fallthru
          _
        // Predicated region
        $region25: #{tpu_custom_call.1} parent=11 // pred_check
          %p228 = pneg %p178
        $region26: #{tpu_custom_call.1} parent=11 // pred_check_branch
          %230 = sbr.rel (%p228) target = $region28
        $region27: #{tpu_custom_call.1} parent=11 // pred_region
          _
        $region28: #{tpu_custom_call.1} parent=11 // pred_fallthru
          _
      $region12: #{tpu_custom_call.1} parent=5 // pred_fallthru
        _
      %p231 = scmp.lt.s32.totalorder %s16, 2
      // Predicated region
      $region29: #{tpu_custom_call.1} parent=5 // pred_check
        %p232 = pneg %p231
      $region30: #{tpu_custom_call.1} parent=5 // pred_check_branch
        %234 = sbr.rel (%p232) target = $region32
      $region31: #{tpu_custom_call.1} parent=5 // pred_region
        // Predicated region
        $region33: #{tpu_custom_call.1} parent=31 // pred_check
          %p235 = pneg %p36
        $region34: #{tpu_custom_call.1} parent=31 // pred_check_branch
          %237 = sbr.rel (%p235) target = $region36
        $region35: #{tpu_custom_call.1} parent=31 // pred_region
          %p238 = scmp.lt.s32.totalorder %s16, 1
          %s239 = scalar_select %p238, %s16, 1
          %s240 = smul.addr %s239, 8
          %s241 = scalar_lea.vmem %s0, %s240
        $region36: #{tpu_custom_call.1} parent=31 // pred_fallthru
          _
        // Predicated region
        $region37: #{tpu_custom_call.1} parent=31 // pred_check
          %p242 = pneg %p62
        $region38: #{tpu_custom_call.1} parent=31 // pred_check_branch
          %244 = sbr.rel (%p242) target = $region40
        $region39: #{tpu_custom_call.1} parent=31 // pred_region
          %s245 = smul.u32 2, %s16
          %p246 = scmp.lt.s32.totalorder %s245, 3
          %s247 = scalar_select %p246, %s245, 3
          %s248 = smul.addr %s247, 8
          %s249 = scalar_lea.vmem %s1, %s248
          %s250 = smul.u32 2, %s16
        $region40: #{tpu_custom_call.1} parent=31 // pred_fallthru
          _
        // Predicated region
        $region41: #{tpu_custom_call.1} parent=31 // pred_check
          %p251 = pneg %p88
        $region42: #{tpu_custom_call.1} parent=31 // pred_check_branch
          %253 = sbr.rel (%p251) target = $region44
        $region43: #{tpu_custom_call.1} parent=31 // pred_region
          %s254 = smul.u32 2, %s16
          %p255 = scmp.lt.s32.totalorder %s254, 3
          %s256 = scalar_select %p255, %s254, 3
          %s257 = smul.addr %s256, 8
          %s258 = scalar_lea.vmem %s2, %s257
          %s259 = smul.u32 2, %s16
        $region44: #{tpu_custom_call.1} parent=31 // pred_fallthru
          _
      $region32: #{tpu_custom_call.1} parent=5 // pred_fallthru
        _
      %p260 = scmp.le.s32.totalorder 1, %s16
      %p261 = scmp.lt.s32.totalorder %s16, 3
      %p262 = pnand %p260, %p261
      %p263 = pneg %p262
      // Predicated region
      $region45: #{tpu_custom_call.1} parent=5 // pred_check
        _
      $region46: #{tpu_custom_call.1} parent=5 // pred_check_branch
        %265 = sbr.rel (%p262) target = $region48
      $region47: #{tpu_custom_call.1} parent=5 // pred_region
        %s266 = ssub.s32 %s16, 1
        %p267 = scmp.lt.s32.totalorder %s21, 1
        %s268 = scalar_select %p267, %s21, 1
        %s269 = smul.addr %s268, 8
        %s270 = scalar_lea.vmem %s0, %s269
        %p271 = pneg %p42
        %p272 = pneg %p39
        %s273 = smul.u32 2, %s21
        %p274 = scmp.lt.s32.totalorder %s273, 3
        %s275 = scalar_select %p274, %s273, 3
        %s276 = smul.addr %s275, 8
        %s277 = scalar_lea.vmem %s1, %s276
        %p278 = pneg %p68
        %p279 = pneg %p65
        %s280 = smul.u32 2, %s21
        %p281 = scmp.lt.s32.totalorder %s280, 3
        %s282 = scalar_select %p281, %s280, 3
        %s283 = smul.addr %s282, 8
        %s284 = scalar_lea.vmem %s2, %s283
        %p285 = pneg %p94
        %p286 = pneg %p91
        %p287 = pneg %p115
        %p288 = pneg %p112
        %p289 = pneg %p136
        %p290 = pneg %p133
        %p291 = pneg %p157
        %p292 = pneg %p154
        %p293 = pneg %p178
        %p294 = pneg %p175
        %p295 = pneg %p204
        %p296 = pneg %p201
        %s297 = sand.u32 %s191, 1
        %s298 = scalar_lea.sflag [#allocation3], %s297
        %s299 = sand.u32 %s191, 1
        %s300 = smul.addr %s299, 8
        %s301 = scalar_lea.vmem [#allocation2], %s300
        %p302 = scmp.lt.s32.totalorder %s21, 1
        %s303 = scalar_select %p302, %s21, 1
        %s304 = smul.addr %s303, 8
        %s305 = scalar_lea.vmem %s0, %s304
        %s306 = smul.u32 2, %s21
        %p307 = scmp.lt.s32.totalorder %s306, 3
        %s308 = scalar_select %p307, %s306, 3
        %s309 = smul.addr %s308, 8
        %s310 = scalar_lea.vmem %s1, %s309
        %s311 = smul.u32 2, %s21
        %s312 = smul.u32 2, %s21
        %p313 = scmp.lt.s32.totalorder %s312, 3
        %s314 = scalar_select %p313, %s312, 3
        %s315 = smul.addr %s314, 8
        %s316 = scalar_lea.vmem %s2, %s315
        %s317 = smul.u32 2, %s21
        %v318 = vld [vmem:[%s305] sm:$0xff]
        %v319 = vld [vmem:[%s310] sm:$0xff]
        %v320 = vld [vmem:[%s310 + $0x8] sm:$0xff]
        %v321 = vld [vmem:[%s316] sm:$0xff]
        %v322 = vld [vmem:[%s316 + $0x8] sm:$0xff]
        %v323 = vld [vmem:[%s3] sm:$0xff]
        %v324 = vld [vmem:[%s4] sm:$0xff]
        %v325 = vld [vmem:[%s4 + $0x8] sm:$0xff]
        %v326 = vld [vmem:[%s4 + $0x10] sm:$0xff]
        %v327 = vld [vmem:[%s4 + $0x18] sm:$0xff]
        %v328 = vld [vmem:[%s4 + $0x20] sm:$0xff]
        %v329 = vld [vmem:[%s4 + $0x28] sm:$0xff]
        %v330 = vld [vmem:[%s4 + $0x30] sm:$0xff]
        %v331 = vld [vmem:[%s4 + $0x38] sm:$0xff]
        %v332 = vld [vmem:[%s4 + $0x40] sm:$0xff]
        %v333 = vld [vmem:[%s4 + $0x48] sm:$0xff]
        %v334 = vld [vmem:[%s4 + $0x50] sm:$0xff]
        %v335 = vld [vmem:[%s4 + $0x58] sm:$0xff]
        %v336 = vld [vmem:[%s4 + $0x60] sm:$0xff]
        %v337 = vld [vmem:[%s4 + $0x68] sm:$0xff]
        %v338 = vld [vmem:[%s4 + $0x70] sm:$0xff]
        %v339 = vld [vmem:[%s4 + $0x78] sm:$0xff]
        %vm340 = vcmask 261120
        %v341 = vsel %vm340, %v318, 0.0
        %342 = vadd.xlane.f32.xlu0 %v341
        %v343 = vpop.xlane.xlu0 %342
        %v344 = vrcp.pop 32.0
        %v345 = vmul.f32 %v343, %v344
        %v346 = vsub.f32 %v318, %v345
        %v347 = vmul.f32 %v346, %v346
        %v348 = vsel %vm340, %v347, 0.0
        %349 = vadd.xlane.f32.xlu0 %v348
        %v350 = vpop.xlane.xlu0 %349
        %v351 = vmul.f32 %v350, %v344
        %v352 = vadd.f32 %v351, 1e-05
        %v353 = vrsqrt.pop %v352
        %v354 = vmul.f32 %v346, %v353
        %v355 = vlaneseq
        %v356 = vshrl.u32 %v355, 7
        %v357 = vsub.s32 0, %v356
        %v358 = vrot.slane %v323, %v357
        %v359 = vmul.f32 %v354, %v358
        %v360 = vlaneseq
        %v361 = vshrl.u32 %v360, 7
        %v362 = vsub.s32 1, %v361
        %v363 = vrot.slane %v323, %v362
        %v364 = vadd.f32 %v359, %v363
        %v365 = vsel %vm340, %v319, 0.0
        %366 = vadd.xlane.f32.xlu0 %v365
        %v367 = vpop.xlane.xlu0 %366
        %v368 = vsel %vm340, %v320, 0.0
        %369 = vadd.xlane.f32.xlu0 %v368
        %v370 = vpop.xlane.xlu0 %369
        %v371 = vmul.f32 %v367, %v344
        %v372 = vmul.f32 %v370, %v344
        %v373 = vsub.f32 %v319, %v371
        %v374 = vsub.f32 %v320, %v372
        %v375 = vmul.f32 %v373, %v373
        %v376 = vmul.f32 %v374, %v374
        %v377 = vsel %vm340, %v375, 0.0
        %378 = vadd.xlane.f32.xlu0 %v377
        %v379 = vpop.xlane.xlu0 %378
        %v380 = vsel %vm340, %v376, 0.0
        %381 = vadd.xlane.f32.xlu0 %v380
        %v382 = vpop.xlane.xlu0 %381
        %v383 = vmul.f32 %v379, %v344
        %v384 = vmul.f32 %v382, %v344
        %v385 = vadd.f32 %v383, 1e-05
        %v386 = vadd.f32 %v384, 1e-05
        %v387 = vrsqrt.pop %v385
        %v388 = vrsqrt.pop %v386
        %v389 = vmul.f32 %v373, %v387
        %v390 = vmul.f32 %v374, %v388
        %v391 = vmul.f32 %v389, %v358
        %v392 = vmul.f32 %v390, %v358
        %v393 = vadd.f32 %v391, %v363
        %v394 = vadd.f32 %v392, %v363
        %v395 = vsel %vm340, %v321, 0.0
        %396 = vadd.xlane.f32.xlu0 %v395
        %v397 = vpop.xlane.xlu0 %396
        %v398 = vsel %vm340, %v322, 0.0
        %399 = vadd.xlane.f32.xlu0 %v398
        %v400 = vpop.xlane.xlu0 %399
        %v401 = vmul.f32 %v397, %v344
        %v402 = vmul.f32 %v400, %v344
        %v403 = vsub.f32 %v321, %v401
        %v404 = vsub.f32 %v322, %v402
        %v405 = vmul.f32 %v403, %v403
        %v406 = vmul.f32 %v404, %v404
        %v407 = vsel %vm340, %v405, 0.0
        %408 = vadd.xlane.f32.xlu0 %v407
        %v409 = vpop.xlane.xlu0 %408
        %v410 = vsel %vm340, %v406, 0.0
        %411 = vadd.xlane.f32.xlu0 %v410
        %v412 = vpop.xlane.xlu0 %411
        %v413 = vmul.f32 %v409, %v344
        %v414 = vmul.f32 %v412, %v344
        %v415 = vadd.f32 %v413, 1e-05
        %v416 = vadd.f32 %v414, 1e-05
        %v417 = vrsqrt.pop %v415
        %v418 = vrsqrt.pop %v416
        %v419 = vmul.f32 %v403, %v417
        %v420 = vmul.f32 %v404, %v418
        %v421 = vmul.f32 %v419, %v358
        %v422 = vmul.f32 %v420, %v358
        %v423 = vadd.f32 %v421, %v363
        %v424 = vadd.f32 %v422, %v363
        %v425 = vlaneseq
        %v426 = vshrl.u32 %v425, 7
        %v427 = vsub.s32 6, %v426
        %v428 = vrot.slane %v323, %v427
        %v430 = vsel %vm340, %v364, 0
        %432 = vmatprep.subr.mxu0 0.0
        %433 = vmatpush1.msra.mxu0 0.0
        %434 = vmatprep.subr.mxu0 0.0
        %435 = vmatpush1.msra.mxu0 0.0
        %436 = vmatprep.subr.mxu0 0.0
        %437 = vmatpush1.msra.mxu0 0.0
        %438 = vmatprep.subr.mxu0 0.0
        %439 = vmatpush1.msra.mxu0 0.0
        %440 = vmatprep.subr.mxu0 0.0
        %441 = vmatpush1.msra.mxu0 0.0
        %442 = vmatprep.subr.mxu0 0.0
        %443 = vmatpush1.msra.mxu0 0.0
        %444 = vmatprep.subr.mxu0 0.0
        %445 = vmatpush1.msra.mxu0 0.0
        %446 = vmatprep.subr.mxu0 0.0
        %447 = vmatpush1.msra.mxu0 0.0
        %448 = vmatprep.subr.mxu0 0.0
        %449 = vmatpush1.msra.mxu0 0.0
        %450 = vmatprep.subr.mxu0 0.0
        %451 = vmatpush1.msra.mxu0 0.0
        %452 = vmatprep.subr.mxu0 0.0
        %453 = vmatpush1.msra.mxu0 0.0
        %454 = vmatprep.subr.mxu0 0.0
        %455 = vmatpush1.msra.mxu0 0.0
        %456 = vmatprep.subr.mxu0 0.0
        %457 = vmatpush1.msra.mxu0 %v327
        %458 = vmatprep.subr.mxu0 0.0
        %459 = vmatpush1.msra.mxu0 %v326
        %460 = vmatprep.subr.mxu0 0.0
        %461 = vmatpush1.msra.mxu0 %v325
        %462 = vmatprep.subr.mxu0 0.0
        %463 = vmatpush1.msra.mxu0 %v324
        %464 = vmatprep.subr.mxu0 0.0
        %465 = vmatpush2.msra.mxu0 0.0
        %466 = vmatprep.subr.mxu0 0.0
        %467 = vmatpush2.msra.mxu0 0.0
        %468 = vmatprep.subr.mxu0 0.0
        %469 = vmatpush2.msra.mxu0 0.0
        %470 = vmatprep.subr.mxu0 0.0
        %471 = vmatpush2.msra.mxu0 0.0
        %472 = vmatprep.subr.mxu0 0.0
        %473 = vmatpush2.msra.mxu0 0.0
        %474 = vmatprep.subr.mxu0 0.0
        %475 = vmatpush2.msra.mxu0 0.0
        %476 = vmatprep.subr.mxu0 0.0
        %477 = vmatpush2.msra.mxu0 0.0
        %478 = vmatprep.subr.mxu0 0.0
        %479 = vmatpush2.msra.mxu0 0.0
        %480 = vmatprep.subr.mxu0 0.0
        %481 = vmatpush2.msra.mxu0 0.0
        %482 = vmatprep.subr.mxu0 0.0
        %483 = vmatpush2.msra.mxu0 0.0
        %484 = vmatprep.subr.mxu0 0.0
        %485 = vmatpush2.msra.mxu0 0.0
        %486 = vmatprep.subr.mxu0 0.0
        %487 = vmatpush2.msra.mxu0 0.0
        %488 = vmatprep.subr.mxu0 0.0
        %489 = vmatpush2.msra.mxu0 0.0
        %490 = vmatprep.subr.mxu0 0.0
        %491 = vmatpush2.msra.mxu0 0.0
        %492 = vmatprep.subr.mxu0 0.0
        %493 = vmatpush2.msra.mxu0 0.0
        %494 = vmatprep.subr.mxu0 0.0
        %495 = vmatpush2.msra.mxu0 0.0
        %496 = vmatprep.mubr.f32.mxu0 0.0
        %497 = vmatmul.mubr.f32.gmra.mxu0 %v430
        %v498 = vpop.f32.mrf.mxu0
        %v499 = vadd.f32 %v428, %v498
        %v500 = vpop.f32.mrf.mxu0
        %501 = vdwg.mxu0
        %503 = vrot.lane.b32.xlu0 %v428, 96
        %v504 = vpop.permute.xlu0 %503
        %v507 = vsel %vm340, %v393, 0
        %v510 = vsel %vm340, %v394, 0
        %512 = vmatprep.subr.mxu0 0.0
        %513 = vmatpush1.msra.mxu0 0.0
        %514 = vmatprep.subr.mxu0 0.0
        %515 = vmatpush1.msra.mxu0 0.0
        %516 = vmatprep.subr.mxu0 0.0
        %517 = vmatpush1.msra.mxu0 0.0
        %518 = vmatprep.subr.mxu0 0.0
        %519 = vmatpush1.msra.mxu0 0.0
        %520 = vmatprep.subr.mxu0 0.0
        %521 = vmatpush1.msra.mxu0 0.0
        %522 = vmatprep.subr.mxu0 0.0
        %523 = vmatpush1.msra.mxu0 0.0
        %524 = vmatprep.subr.mxu0 0.0
        %525 = vmatpush1.msra.mxu0 0.0
        %526 = vmatprep.subr.mxu0 0.0
        %527 = vmatpush1.msra.mxu0 0.0
        %528 = vmatprep.subr.mxu0 0.0
        %529 = vmatpush1.msra.mxu0 0.0
        %530 = vmatprep.subr.mxu0 0.0
        %531 = vmatpush1.msra.mxu0 0.0
        %532 = vmatprep.subr.mxu0 0.0
        %533 = vmatpush1.msra.mxu0 0.0
        %534 = vmatprep.subr.mxu0 0.0
        %535 = vmatpush1.msra.mxu0 0.0
        %536 = vmatprep.subr.mxu0 0.0
        %537 = vmatpush1.msra.mxu0 %v331
        %538 = vmatprep.subr.mxu0 0.0
        %539 = vmatpush1.msra.mxu0 %v330
        %540 = vmatprep.subr.mxu0 0.0
        %541 = vmatpush1.msra.mxu0 %v329
        %542 = vmatprep.subr.mxu0 0.0
        %543 = vmatpush1.msra.mxu0 %v328
        %544 = vmatprep.subr.mxu0 0.0
        %545 = vmatpush2.msra.mxu0 0.0
        %546 = vmatprep.subr.mxu0 0.0
        %547 = vmatpush2.msra.mxu0 0.0
        %548 = vmatprep.subr.mxu0 0.0
        %549 = vmatpush2.msra.mxu0 0.0
        %550 = vmatprep.subr.mxu0 0.0
        %551 = vmatpush2.msra.mxu0 0.0
        %552 = vmatprep.subr.mxu0 0.0
        %553 = vmatpush2.msra.mxu0 0.0
        %554 = vmatprep.subr.mxu0 0.0
        %555 = vmatpush2.msra.mxu0 0.0
        %556 = vmatprep.subr.mxu0 0.0
        %557 = vmatpush2.msra.mxu0 0.0
        %558 = vmatprep.subr.mxu0 0.0
        %559 = vmatpush2.msra.mxu0 0.0
        %560 = vmatprep.subr.mxu0 0.0
        %561 = vmatpush2.msra.mxu0 0.0
        %562 = vmatprep.subr.mxu0 0.0
        %563 = vmatpush2.msra.mxu0 0.0
        %564 = vmatprep.subr.mxu0 0.0
        %565 = vmatpush2.msra.mxu0 0.0
        %566 = vmatprep.subr.mxu0 0.0
        %567 = vmatpush2.msra.mxu0 0.0
        %568 = vmatprep.subr.mxu0 0.0
        %569 = vmatpush2.msra.mxu0 0.0
        %570 = vmatprep.subr.mxu0 0.0
        %571 = vmatpush2.msra.mxu0 0.0
        %572 = vmatprep.subr.mxu0 0.0
        %573 = vmatpush2.msra.mxu0 0.0
        %574 = vmatprep.subr.mxu0 0.0
        %575 = vmatpush2.msra.mxu0 0.0
        %576 = vmatprep.mubr.f32.mxu0 0.0
        %577 = vmatmul.mubr.f32.gmra.mxu0 %v507
        %v578 = vpop.f32.mrf.mxu0
        %v579 = vadd.f32 %v504, %v578
        %v580 = vpop.f32.mrf.mxu0
        %581 = vmatprep.mubr.f32.mxu0 0.0
        %582 = vmatmul.mubr.f32.gmra.mxu0 %v510
        %v583 = vpop.f32.mrf.mxu0
        %v584 = vadd.f32 %v504, %v583
        %v585 = vpop.f32.mrf.mxu0
        %586 = vdwg.mxu0
        %587 = vrot.lane.b32.xlu0 %v428, 64
        %v588 = vpop.permute.xlu0 %587
        %v591 = vsel %vm340, %v423, 0
        %v594 = vsel %vm340, %v424, 0
        %596 = vmatprep.subr.mxu0 0.0
        %597 = vmatpush1.msra.mxu0 0.0
        %598 = vmatprep.subr.mxu0 0.0
        %599 = vmatpush1.msra.mxu0 0.0
        %600 = vmatprep.subr.mxu0 0.0
        %601 = vmatpush1.msra.mxu0 0.0
        %602 = vmatprep.subr.mxu0 0.0
        %603 = vmatpush1.msra.mxu0 0.0
        %604 = vmatprep.subr.mxu0 0.0
        %605 = vmatpush1.msra.mxu0 0.0
        %606 = vmatprep.subr.mxu0 0.0
        %607 = vmatpush1.msra.mxu0 0.0
        %608 = vmatprep.subr.mxu0 0.0
        %609 = vmatpush1.msra.mxu0 0.0
        %610 = vmatprep.subr.mxu0 0.0
        %611 = vmatpush1.msra.mxu0 0.0
        %612 = vmatprep.subr.mxu0 0.0
        %613 = vmatpush1.msra.mxu0 0.0
        %614 = vmatprep.subr.mxu0 0.0
        %615 = vmatpush1.msra.mxu0 0.0
        %616 = vmatprep.subr.mxu0 0.0
        %617 = vmatpush1.msra.mxu0 0.0
        %618 = vmatprep.subr.mxu0 0.0
        %619 = vmatpush1.msra.mxu0 0.0
        %620 = vmatprep.subr.mxu0 0.0
        %621 = vmatpush1.msra.mxu0 %v335
        %622 = vmatprep.subr.mxu0 0.0
        %623 = vmatpush1.msra.mxu0 %v334
        %624 = vmatprep.subr.mxu0 0.0
        %625 = vmatpush1.msra.mxu0 %v333
        %626 = vmatprep.subr.mxu0 0.0
        %627 = vmatpush1.msra.mxu0 %v332
        %628 = vmatprep.subr.mxu0 0.0
        %629 = vmatpush2.msra.mxu0 0.0
        %630 = vmatprep.subr.mxu0 0.0
        %631 = vmatpush2.msra.mxu0 0.0
        %632 = vmatprep.subr.mxu0 0.0
        %633 = vmatpush2.msra.mxu0 0.0
        %634 = vmatprep.subr.mxu0 0.0
        %635 = vmatpush2.msra.mxu0 0.0
        %636 = vmatprep.subr.mxu0 0.0
        %637 = vmatpush2.msra.mxu0 0.0
        %638 = vmatprep.subr.mxu0 0.0
        %639 = vmatpush2.msra.mxu0 0.0
        %640 = vmatprep.subr.mxu0 0.0
        %641 = vmatpush2.msra.mxu0 0.0
        %642 = vmatprep.subr.mxu0 0.0
        %643 = vmatpush2.msra.mxu0 0.0
        %644 = vmatprep.subr.mxu0 0.0
        %645 = vmatpush2.msra.mxu0 0.0
        %646 = vmatprep.subr.mxu0 0.0
        %647 = vmatpush2.msra.mxu0 0.0
        %648 = vmatprep.subr.mxu0 0.0
        %649 = vmatpush2.msra.mxu0 0.0
        %650 = vmatprep.subr.mxu0 0.0
        %651 = vmatpush2.msra.mxu0 0.0
        %652 = vmatprep.subr.mxu0 0.0
        %653 = vmatpush2.msra.mxu0 0.0
        %654 = vmatprep.subr.mxu0 0.0
        %655 = vmatpush2.msra.mxu0 0.0
        %656 = vmatprep.subr.mxu0 0.0
        %657 = vmatpush2.msra.mxu0 0.0
        %658 = vmatprep.subr.mxu0 0.0
        %659 = vmatpush2.msra.mxu0 0.0
        %660 = vmatprep.mubr.f32.mxu0 0.0
        %661 = vmatmul.mubr.f32.gmra.mxu0 %v591
        %v662 = vpop.f32.mrf.mxu0
        %v663 = vadd.f32 %v588, %v662
        %v664 = vpop.f32.mrf.mxu0
        %665 = vmatprep.mubr.f32.mxu0 0.0
        %666 = vmatmul.mubr.f32.gmra.mxu0 %v594
        %v667 = vpop.f32.mrf.mxu0
        %v668 = vadd.f32 %v588, %v667
        %v669 = vpop.f32.mrf.mxu0
        %670 = vdwg.mxu0
        %672 = vrot.lane.b32.xlu0 %v499, 120
        %v673 = vpop.permute.xlu0 %672
        %674 = vrot.lane.b32.xlu0 %v499, 112
        %v675 = vpop.permute.xlu0 %674
        %676 = vrot.lane.b32.xlu0 %v499, 104
        %v677 = vpop.permute.xlu0 %676
        %680 = vrot.lane.b32.xlu0 %v579, 120
        %v681 = vpop.permute.xlu0 %680
        %682 = vrot.lane.b32.xlu0 %v584, 120
        %v683 = vpop.permute.xlu0 %682
        %684 = vrot.lane.b32.xlu0 %v579, 112
        %v685 = vpop.permute.xlu0 %684
        %686 = vrot.lane.b32.xlu0 %v584, 112
        %v687 = vpop.permute.xlu0 %686
        %688 = vrot.lane.b32.xlu0 %v579, 104
        %v689 = vpop.permute.xlu0 %688
        %690 = vrot.lane.b32.xlu0 %v584, 104
        %v691 = vpop.permute.xlu0 %690
        %694 = vrot.lane.b32.xlu0 %v663, 120
        %v695 = vpop.permute.xlu0 %694
        %696 = vrot.lane.b32.xlu0 %v668, 120
        %v697 = vpop.permute.xlu0 %696
        %700 = vrot.lane.b32.xlu0 %v663, 112
        %v701 = vpop.permute.xlu0 %700
        %702 = vrot.lane.b32.xlu0 %v668, 112
        %v703 = vpop.permute.xlu0 %702
        %706 = vrot.lane.b32.xlu0 %v663, 104
        %v707 = vpop.permute.xlu0 %706
        %708 = vrot.lane.b32.xlu0 %v668, 104
        %v709 = vpop.permute.xlu0 %708
        %vm712 = vcmask 64512
        %v713 = vsel %vm712, %v499, 0
        %v715 = vsel %vm712, %v579, 0
        %v717 = vsel %vm712, %v584, 0
        %719 = vmatprep.subr.mxu0 0.0
        %720 = vmatpush1.xpose.msra.mxu0 0.0
        %721 = vmatprep.subr.mxu0 0.0
        %722 = vmatpush1.xpose.msra.mxu0 0.0
        %723 = vmatprep.subr.mxu0 0.0
        %724 = vmatpush1.xpose.msra.mxu0 0.0
        %725 = vmatprep.subr.mxu0 0.0
        %726 = vmatpush1.xpose.msra.mxu0 0.0
        %727 = vmatprep.subr.mxu0 0.0
        %728 = vmatpush1.xpose.msra.mxu0 0.0
        %729 = vmatprep.subr.mxu0 0.0
        %730 = vmatpush1.xpose.msra.mxu0 0.0
        %731 = vmatprep.subr.mxu0 0.0
        %732 = vmatpush1.xpose.msra.mxu0 0.0
        %733 = vmatprep.subr.mxu0 0.0
        %734 = vmatpush1.xpose.msra.mxu0 0.0
        %735 = vmatprep.subr.mxu0 0.0
        %736 = vmatpush1.xpose.msra.mxu0 0.0
        %737 = vmatprep.subr.mxu0 0.0
        %738 = vmatpush1.xpose.msra.mxu0 0.0
        %739 = vmatprep.subr.mxu0 0.0
        %740 = vmatpush1.xpose.msra.mxu0 0.0
        %741 = vmatprep.subr.mxu0 0.0
        %742 = vmatpush1.xpose.msra.mxu0 0.0
        %743 = vmatprep.subr.mxu0 0.0
        %744 = vmatpush1.xpose.msra.mxu0 0.0
        %745 = vmatprep.subr.mxu0 0.0
        %746 = vmatpush1.xpose.msra.mxu0 0.0
        %747 = vmatprep.subr.mxu0 0.0
        %748 = vmatpush1.xpose.msra.mxu0 %v717
        %749 = vmatprep.subr.mxu0 0.0
        %750 = vmatpush1.xpose.msra.mxu0 %v715
        %751 = vmatprep.subr.mxu0 0.0
        %752 = vmatpush2.xpose.msra.mxu0 0.0
        %753 = vmatprep.subr.mxu0 0.0
        %754 = vmatpush2.xpose.msra.mxu0 0.0
        %755 = vmatprep.subr.mxu0 0.0
        %756 = vmatpush2.xpose.msra.mxu0 0.0
        %757 = vmatprep.subr.mxu0 0.0
        %758 = vmatpush2.xpose.msra.mxu0 0.0
        %759 = vmatprep.subr.mxu0 0.0
        %760 = vmatpush2.xpose.msra.mxu0 0.0
        %761 = vmatprep.subr.mxu0 0.0
        %762 = vmatpush2.xpose.msra.mxu0 0.0
        %763 = vmatprep.subr.mxu0 0.0
        %764 = vmatpush2.xpose.msra.mxu0 0.0
        %765 = vmatprep.subr.mxu0 0.0
        %766 = vmatpush2.xpose.msra.mxu0 0.0
        %767 = vmatprep.subr.mxu0 0.0
        %768 = vmatpush2.xpose.msra.mxu0 0.0
        %769 = vmatprep.subr.mxu0 0.0
        %770 = vmatpush2.xpose.msra.mxu0 0.0
        %771 = vmatprep.subr.mxu0 0.0
        %772 = vmatpush2.xpose.msra.mxu0 0.0
        %773 = vmatprep.subr.mxu0 0.0
        %774 = vmatpush2.xpose.msra.mxu0 0.0
        %775 = vmatprep.subr.mxu0 0.0
        %776 = vmatpush2.xpose.msra.mxu0 0.0
        %777 = vmatprep.subr.mxu0 0.0
        %778 = vmatpush2.xpose.msra.mxu0 0.0
        %779 = vmatprep.subr.mxu0 0.0
        %780 = vmatpush2.xpose.msra.mxu0 0.0
        %781 = vmatprep.subr.mxu0 0.0
        %782 = vmatpush2.xpose.msra.mxu0 0.0
        %783 = vmatprep.mubr.f32.mxu0 0.0
        %784 = vmatmul.mubr.f32.gmra.mxu0 %v713
        %v785 = vpop.f32.mrf.mxu0
        %v786 = vadd.f32 0.0, %v785
        %v787 = vpop.f32.mrf.mxu0
        %788 = vdwg.mxu0
        %v789 = vsel %vm712, %v673, 0
        %v791 = vsel %vm712, %v681, 0
        %v793 = vsel %vm712, %v683, 0
        %795 = vmatprep.subr.mxu0 0.0
        %796 = vmatpush1.xpose.msra.mxu0 0.0
        %797 = vmatprep.subr.mxu0 0.0
        %798 = vmatpush1.xpose.msra.mxu0 0.0
        %799 = vmatprep.subr.mxu0 0.0
        %800 = vmatpush1.xpose.msra.mxu0 0.0
        %801 = vmatprep.subr.mxu0 0.0
        %802 = vmatpush1.xpose.msra.mxu0 0.0
        %803 = vmatprep.subr.mxu0 0.0
        %804 = vmatpush1.xpose.msra.mxu0 0.0
        %805 = vmatprep.subr.mxu0 0.0
        %806 = vmatpush1.xpose.msra.mxu0 0.0
        %807 = vmatprep.subr.mxu0 0.0
        %808 = vmatpush1.xpose.msra.mxu0 0.0
        %809 = vmatprep.subr.mxu0 0.0
        %810 = vmatpush1.xpose.msra.mxu0 0.0
        %811 = vmatprep.subr.mxu0 0.0
        %812 = vmatpush1.xpose.msra.mxu0 0.0
        %813 = vmatprep.subr.mxu0 0.0
        %814 = vmatpush1.xpose.msra.mxu0 0.0
        %815 = vmatprep.subr.mxu0 0.0
        %816 = vmatpush1.xpose.msra.mxu0 0.0
        %817 = vmatprep.subr.mxu0 0.0
        %818 = vmatpush1.xpose.msra.mxu0 0.0
        %819 = vmatprep.subr.mxu0 0.0
        %820 = vmatpush1.xpose.msra.mxu0 0.0
        %821 = vmatprep.subr.mxu0 0.0
        %822 = vmatpush1.xpose.msra.mxu0 0.0
        %823 = vmatprep.subr.mxu0 0.0
        %824 = vmatpush1.xpose.msra.mxu0 %v793
        %825 = vmatprep.subr.mxu0 0.0
        %826 = vmatpush1.xpose.msra.mxu0 %v791
        %827 = vmatprep.subr.mxu0 0.0
        %828 = vmatpush2.xpose.msra.mxu0 0.0
        %829 = vmatprep.subr.mxu0 0.0
        %830 = vmatpush2.xpose.msra.mxu0 0.0
        %831 = vmatprep.subr.mxu0 0.0
        %832 = vmatpush2.xpose.msra.mxu0 0.0
        %833 = vmatprep.subr.mxu0 0.0
        %834 = vmatpush2.xpose.msra.mxu0 0.0
        %835 = vmatprep.subr.mxu0 0.0
        %836 = vmatpush2.xpose.msra.mxu0 0.0
        %837 = vmatprep.subr.mxu0 0.0
        %838 = vmatpush2.xpose.msra.mxu0 0.0
        %839 = vmatprep.subr.mxu0 0.0
        %840 = vmatpush2.xpose.msra.mxu0 0.0
        %841 = vmatprep.subr.mxu0 0.0
        %842 = vmatpush2.xpose.msra.mxu0 0.0
        %843 = vmatprep.subr.mxu0 0.0
        %844 = vmatpush2.xpose.msra.mxu0 0.0
        %845 = vmatprep.subr.mxu0 0.0
        %846 = vmatpush2.xpose.msra.mxu0 0.0
        %847 = vmatprep.subr.mxu0 0.0
        %848 = vmatpush2.xpose.msra.mxu0 0.0
        %849 = vmatprep.subr.mxu0 0.0
        %850 = vmatpush2.xpose.msra.mxu0 0.0
        %851 = vmatprep.subr.mxu0 0.0
        %852 = vmatpush2.xpose.msra.mxu0 0.0
        %853 = vmatprep.subr.mxu0 0.0
        %854 = vmatpush2.xpose.msra.mxu0 0.0
        %855 = vmatprep.subr.mxu0 0.0
        %856 = vmatpush2.xpose.msra.mxu0 0.0
        %857 = vmatprep.subr.mxu0 0.0
        %858 = vmatpush2.xpose.msra.mxu0 0.0
        %859 = vmatprep.mubr.f32.mxu0 0.0
        %860 = vmatmul.mubr.f32.gmra.mxu0 %v789
        %v861 = vpop.f32.mrf.mxu0
        %v862 = vadd.f32 0.0, %v861
        %v863 = vpop.f32.mrf.mxu0
        %864 = vdwg.mxu0
        %v865 = vsel %vm712, %v675, 0
        %v867 = vsel %vm712, %v685, 0
        %v869 = vsel %vm712, %v687, 0
        %871 = vmatprep.subr.mxu0 0.0
        %872 = vmatpush1.xpose.msra.mxu0 0.0
        %873 = vmatprep.subr.mxu0 0.0
        %874 = vmatpush1.xpose.msra.mxu0 0.0
        %875 = vmatprep.subr.mxu0 0.0
        %876 = vmatpush1.xpose.msra.mxu0 0.0
        %877 = vmatprep.subr.mxu0 0.0
        %878 = vmatpush1.xpose.msra.mxu0 0.0
        %879 = vmatprep.subr.mxu0 0.0
        %880 = vmatpush1.xpose.msra.mxu0 0.0
        %881 = vmatprep.subr.mxu0 0.0
        %882 = vmatpush1.xpose.msra.mxu0 0.0
        %883 = vmatprep.subr.mxu0 0.0
        %884 = vmatpush1.xpose.msra.mxu0 0.0
        %885 = vmatprep.subr.mxu0 0.0
        %886 = vmatpush1.xpose.msra.mxu0 0.0
        %887 = vmatprep.subr.mxu0 0.0
        %888 = vmatpush1.xpose.msra.mxu0 0.0
        %889 = vmatprep.subr.mxu0 0.0
        %890 = vmatpush1.xpose.msra.mxu0 0.0
        %891 = vmatprep.subr.mxu0 0.0
        %892 = vmatpush1.xpose.msra.mxu0 0.0
        %893 = vmatprep.subr.mxu0 0.0
        %894 = vmatpush1.xpose.msra.mxu0 0.0
        %895 = vmatprep.subr.mxu0 0.0
        %896 = vmatpush1.xpose.msra.mxu0 0.0
        %897 = vmatprep.subr.mxu0 0.0
        %898 = vmatpush1.xpose.msra.mxu0 0.0
        %899 = vmatprep.subr.mxu0 0.0
        %900 = vmatpush1.xpose.msra.mxu0 %v869
        %901 = vmatprep.subr.mxu0 0.0
        %902 = vmatpush1.xpose.msra.mxu0 %v867
        %903 = vmatprep.subr.mxu0 0.0
        %904 = vmatpush2.xpose.msra.mxu0 0.0
        %905 = vmatprep.subr.mxu0 0.0
        %906 = vmatpush2.xpose.msra.mxu0 0.0
        %907 = vmatprep.subr.mxu0 0.0
        %908 = vmatpush2.xpose.msra.mxu0 0.0
        %909 = vmatprep.subr.mxu0 0.0
        %910 = vmatpush2.xpose.msra.mxu0 0.0
        %911 = vmatprep.subr.mxu0 0.0
        %912 = vmatpush2.xpose.msra.mxu0 0.0
        %913 = vmatprep.subr.mxu0 0.0
        %914 = vmatpush2.xpose.msra.mxu0 0.0
        %915 = vmatprep.subr.mxu0 0.0
        %916 = vmatpush2.xpose.msra.mxu0 0.0
        %917 = vmatprep.subr.mxu0 0.0
        %918 = vmatpush2.xpose.msra.mxu0 0.0
        %919 = vmatprep.subr.mxu0 0.0
        %920 = vmatpush2.xpose.msra.mxu0 0.0
        %921 = vmatprep.subr.mxu0 0.0
        %922 = vmatpush2.xpose.msra.mxu0 0.0
        %923 = vmatprep.subr.mxu0 0.0
        %924 = vmatpush2.xpose.msra.mxu0 0.0
        %925 = vmatprep.subr.mxu0 0.0
        %926 = vmatpush2.xpose.msra.mxu0 0.0
        %927 = vmatprep.subr.mxu0 0.0
        %928 = vmatpush2.xpose.msra.mxu0 0.0
        %929 = vmatprep.subr.mxu0 0.0
        %930 = vmatpush2.xpose.msra.mxu0 0.0
        %931 = vmatprep.subr.mxu0 0.0
        %932 = vmatpush2.xpose.msra.mxu0 0.0
        %933 = vmatprep.subr.mxu0 0.0
        %934 = vmatpush2.xpose.msra.mxu0 0.0
        %935 = vmatprep.mubr.f32.mxu0 0.0
        %936 = vmatmul.mubr.f32.gmra.mxu0 %v865
        %v937 = vpop.f32.mrf.mxu0
        %v938 = vadd.f32 0.0, %v937
        %v939 = vpop.f32.mrf.mxu0
        %940 = vdwg.mxu0
        %v941 = vsel %vm712, %v677, 0
        %v943 = vsel %vm712, %v689, 0
        %v945 = vsel %vm712, %v691, 0
        %947 = vmatprep.subr.mxu0 0.0
        %948 = vmatpush1.xpose.msra.mxu0 0.0
        %949 = vmatprep.subr.mxu0 0.0
        %950 = vmatpush1.xpose.msra.mxu0 0.0
        %951 = vmatprep.subr.mxu0 0.0
        %952 = vmatpush1.xpose.msra.mxu0 0.0
        %953 = vmatprep.subr.mxu0 0.0
        %954 = vmatpush1.xpose.msra.mxu0 0.0
        %955 = vmatprep.subr.mxu0 0.0
        %956 = vmatpush1.xpose.msra.mxu0 0.0
        %957 = vmatprep.subr.mxu0 0.0
        %958 = vmatpush1.xpose.msra.mxu0 0.0
        %959 = vmatprep.subr.mxu0 0.0
        %960 = vmatpush1.xpose.msra.mxu0 0.0
        %961 = vmatprep.subr.mxu0 0.0
        %962 = vmatpush1.xpose.msra.mxu0 0.0
        %963 = vmatprep.subr.mxu0 0.0
        %964 = vmatpush1.xpose.msra.mxu0 0.0
        %965 = vmatprep.subr.mxu0 0.0
        %966 = vmatpush1.xpose.msra.mxu0 0.0
        %967 = vmatprep.subr.mxu0 0.0
        %968 = vmatpush1.xpose.msra.mxu0 0.0
        %969 = vmatprep.subr.mxu0 0.0
        %970 = vmatpush1.xpose.msra.mxu0 0.0
        %971 = vmatprep.subr.mxu0 0.0
        %972 = vmatpush1.xpose.msra.mxu0 0.0
        %973 = vmatprep.subr.mxu0 0.0
        %974 = vmatpush1.xpose.msra.mxu0 0.0
        %975 = vmatprep.subr.mxu0 0.0
        %976 = vmatpush1.xpose.msra.mxu0 %v945
        %977 = vmatprep.subr.mxu0 0.0
        %978 = vmatpush1.xpose.msra.mxu0 %v943
        %979 = vmatprep.subr.mxu0 0.0
        %980 = vmatpush2.xpose.msra.mxu0 0.0
        %981 = vmatprep.subr.mxu0 0.0
        %982 = vmatpush2.xpose.msra.mxu0 0.0
        %983 = vmatprep.subr.mxu0 0.0
        %984 = vmatpush2.xpose.msra.mxu0 0.0
        %985 = vmatprep.subr.mxu0 0.0
        %986 = vmatpush2.xpose.msra.mxu0 0.0
        %987 = vmatprep.subr.mxu0 0.0
        %988 = vmatpush2.xpose.msra.mxu0 0.0
        %989 = vmatprep.subr.mxu0 0.0
        %990 = vmatpush2.xpose.msra.mxu0 0.0
        %991 = vmatprep.subr.mxu0 0.0
        %992 = vmatpush2.xpose.msra.mxu0 0.0
        %993 = vmatprep.subr.mxu0 0.0
        %994 = vmatpush2.xpose.msra.mxu0 0.0
        %995 = vmatprep.subr.mxu0 0.0
        %996 = vmatpush2.xpose.msra.mxu0 0.0
        %997 = vmatprep.subr.mxu0 0.0
        %998 = vmatpush2.xpose.msra.mxu0 0.0
        %999 = vmatprep.subr.mxu0 0.0
        %1000 = vmatpush2.xpose.msra.mxu0 0.0
        %1001 = vmatprep.subr.mxu0 0.0
        %1002 = vmatpush2.xpose.msra.mxu0 0.0
        %1003 = vmatprep.subr.mxu0 0.0
        %1004 = vmatpush2.xpose.msra.mxu0 0.0
        %1005 = vmatprep.subr.mxu0 0.0
        %1006 = vmatpush2.xpose.msra.mxu0 0.0
        %1007 = vmatprep.subr.mxu0 0.0
        %1008 = vmatpush2.xpose.msra.mxu0 0.0
        %1009 = vmatprep.subr.mxu0 0.0
        %1010 = vmatpush2.xpose.msra.mxu0 0.0
        %1011 = vmatprep.mubr.f32.mxu0 0.0
        %1012 = vmatmul.mubr.f32.gmra.mxu0 %v941
        %v1013 = vpop.f32.mrf.mxu0
        %v1014 = vadd.f32 0.0, %v1013
        %v1015 = vpop.f32.mrf.mxu0
        %1016 = vdwg.mxu0
        %vm1017 = vcmask 130048
        %v1018 = vsel %vm1017, %v786, -inf
        %1019 = vmax.xlane.f32.xlu0 %v1018
        %v1020 = vpop.xlane.xlu0 %1019
        %v1021 = vsel %vm1017, %v862, -inf
        %1022 = vmax.xlane.f32.xlu0 %v1021
        %v1023 = vpop.xlane.xlu0 %1022
        %v1024 = vsel %vm1017, %v938, -inf
        %1025 = vmax.xlane.f32.xlu0 %v1024
        %v1026 = vpop.xlane.xlu0 %1025
        %v1027 = vsel %vm1017, %v1014, -inf
        %1028 = vmax.xlane.f32.xlu0 %v1027
        %v1029 = vpop.xlane.xlu0 %1028
        %v1030 = vsub.f32 %v786, %v1020
        %v1031 = vsub.f32 %v862, %v1023
        %v1032 = vsub.f32 %v938, %v1026
        %v1033 = vsub.f32 %v1014, %v1029
        %v1034 = vmul.f32 %v1030, 1.442695
        %v1035 = vpow.pop %v1034
        %v1036 = vmul.f32 %v1031, 1.442695
        %v1037 = vpow.pop %v1036
        %v1038 = vmul.f32 %v1032, 1.442695
        %v1039 = vpow.pop %v1038
        %v1040 = vmul.f32 %v1033, 1.442695
        %v1041 = vpow.pop %v1040
        %v1042 = vsel %vm1017, %v1035, 0.0
        %1043 = vadd.xlane.f32.xlu0 %v1042
        %v1044 = vpop.xlane.xlu0 %1043
        %v1045 = vsel %vm1017, %v1037, 0.0
        %1046 = vadd.xlane.f32.xlu0 %v1045
        %v1047 = vpop.xlane.xlu0 %1046
        %v1048 = vsel %vm1017, %v1039, 0.0
        %1049 = vadd.xlane.f32.xlu0 %v1048
        %v1050 = vpop.xlane.xlu0 %1049
        %v1051 = vsel %vm1017, %v1041, 0.0
        %1052 = vadd.xlane.f32.xlu0 %v1051
        %v1053 = vpop.xlane.xlu0 %1052
        %v1054 = vrcp.pop %v1044
        %v1055 = vrcp.pop %v1047
        %v1056 = vrcp.pop %v1050
        %v1057 = vrcp.pop %v1053
        %v1058 = vmul.f32 %v1035, %v1054
        %v1059 = vmul.f32 %v1037, %v1055
        %v1060 = vmul.f32 %v1039, %v1056
        %v1061 = vmul.f32 %v1041, %v1057
        %v1063 = vsel %vm1017, %v1058, 0
        %1065 = vmatprep.subr.mxu0 0.0
        %1066 = vmatpush1.msra.mxu0 0.0
        %1067 = vmatprep.subr.mxu0 0.0
        %1068 = vmatpush1.msra.mxu0 0.0
        %1069 = vmatprep.subr.mxu0 0.0
        %1070 = vmatpush1.msra.mxu0 0.0
        %1071 = vmatprep.subr.mxu0 0.0
        %1072 = vmatpush1.msra.mxu0 0.0
        %1073 = vmatprep.subr.mxu0 0.0
        %1074 = vmatpush1.msra.mxu0 0.0
        %1075 = vmatprep.subr.mxu0 0.0
        %1076 = vmatpush1.msra.mxu0 0.0
        %1077 = vmatprep.subr.mxu0 0.0
        %1078 = vmatpush1.msra.mxu0 0.0
        %1079 = vmatprep.subr.mxu0 0.0
        %1080 = vmatpush1.msra.mxu0 0.0
        %1081 = vmatprep.subr.mxu0 0.0
        %1082 = vmatpush1.msra.mxu0 0.0
        %1083 = vmatprep.subr.mxu0 0.0
        %1084 = vmatpush1.msra.mxu0 0.0
        %1085 = vmatprep.subr.mxu0 0.0
        %1086 = vmatpush1.msra.mxu0 0.0
        %1087 = vmatprep.subr.mxu0 0.0
        %1088 = vmatpush1.msra.mxu0 0.0
        %1089 = vmatprep.subr.mxu0 0.0
        %1090 = vmatpush1.msra.mxu0 0.0
        %1091 = vmatprep.subr.mxu0 0.0
        %1092 = vmatpush1.msra.mxu0 0.0
        %1093 = vmatprep.subr.mxu0 0.0
        %1094 = vmatpush1.msra.mxu0 %v668
        %1095 = vmatprep.subr.mxu0 0.0
        %1096 = vmatpush1.msra.mxu0 %v663
        %1097 = vmatprep.subr.mxu0 0.0
        %1098 = vmatpush2.msra.mxu0 0.0
        %1099 = vmatprep.subr.mxu0 0.0
        %1100 = vmatpush2.msra.mxu0 0.0
        %1101 = vmatprep.subr.mxu0 0.0
        %1102 = vmatpush2.msra.mxu0 0.0
        %1103 = vmatprep.subr.mxu0 0.0
        %1104 = vmatpush2.msra.mxu0 0.0
        %1105 = vmatprep.subr.mxu0 0.0
        %1106 = vmatpush2.msra.mxu0 0.0
        %1107 = vmatprep.subr.mxu0 0.0
        %1108 = vmatpush2.msra.mxu0 0.0
        %1109 = vmatprep.subr.mxu0 0.0
        %1110 = vmatpush2.msra.mxu0 0.0
        %1111 = vmatprep.subr.mxu0 0.0
        %1112 = vmatpush2.msra.mxu0 0.0
        %1113 = vmatprep.subr.mxu0 0.0
        %1114 = vmatpush2.msra.mxu0 0.0
        %1115 = vmatprep.subr.mxu0 0.0
        %1116 = vmatpush2.msra.mxu0 0.0
        %1117 = vmatprep.subr.mxu0 0.0
        %1118 = vmatpush2.msra.mxu0 0.0
        %1119 = vmatprep.subr.mxu0 0.0
        %1120 = vmatpush2.msra.mxu0 0.0
        %1121 = vmatprep.subr.mxu0 0.0
        %1122 = vmatpush2.msra.mxu0 0.0
        %1123 = vmatprep.subr.mxu0 0.0
        %1124 = vmatpush2.msra.mxu0 0.0
        %1125 = vmatprep.subr.mxu0 0.0
        %1126 = vmatpush2.msra.mxu0 0.0
        %1127 = vmatprep.subr.mxu0 0.0
        %1128 = vmatpush2.msra.mxu0 0.0
        %1129 = vmatprep.mubr.f32.mxu0 0.0
        %1130 = vmatmul.mubr.f32.gmra.mxu0 %v1063
        %v1131 = vpop.f32.mrf.mxu0
        %v1132 = vadd.f32 0.0, %v1131
        %v1133 = vpop.f32.mrf.mxu0
        %1134 = vdwg.mxu0
        %v1136 = vsel %vm1017, %v1059, 0
        %1138 = vmatprep.subr.mxu0 0.0
        %1139 = vmatpush1.msra.mxu0 0.0
        %1140 = vmatprep.subr.mxu0 0.0
        %1141 = vmatpush1.msra.mxu0 0.0
        %1142 = vmatprep.subr.mxu0 0.0
        %1143 = vmatpush1.msra.mxu0 0.0
        %1144 = vmatprep.subr.mxu0 0.0
        %1145 = vmatpush1.msra.mxu0 0.0
        %1146 = vmatprep.subr.mxu0 0.0
        %1147 = vmatpush1.msra.mxu0 0.0
        %1148 = vmatprep.subr.mxu0 0.0
        %1149 = vmatpush1.msra.mxu0 0.0
        %1150 = vmatprep.subr.mxu0 0.0
        %1151 = vmatpush1.msra.mxu0 0.0
        %1152 = vmatprep.subr.mxu0 0.0
        %1153 = vmatpush1.msra.mxu0 0.0
        %1154 = vmatprep.subr.mxu0 0.0
        %1155 = vmatpush1.msra.mxu0 0.0
        %1156 = vmatprep.subr.mxu0 0.0
        %1157 = vmatpush1.msra.mxu0 0.0
        %1158 = vmatprep.subr.mxu0 0.0
        %1159 = vmatpush1.msra.mxu0 0.0
        %1160 = vmatprep.subr.mxu0 0.0
        %1161 = vmatpush1.msra.mxu0 0.0
        %1162 = vmatprep.subr.mxu0 0.0
        %1163 = vmatpush1.msra.mxu0 0.0
        %1164 = vmatprep.subr.mxu0 0.0
        %1165 = vmatpush1.msra.mxu0 0.0
        %1166 = vmatprep.subr.mxu0 0.0
        %1167 = vmatpush1.msra.mxu0 %v697
        %1168 = vmatprep.subr.mxu0 0.0
        %1169 = vmatpush1.msra.mxu0 %v695
        %1170 = vmatprep.subr.mxu0 0.0
        %1171 = vmatpush2.msra.mxu0 0.0
        %1172 = vmatprep.subr.mxu0 0.0
        %1173 = vmatpush2.msra.mxu0 0.0
        %1174 = vmatprep.subr.mxu0 0.0
        %1175 = vmatpush2.msra.mxu0 0.0
        %1176 = vmatprep.subr.mxu0 0.0
        %1177 = vmatpush2.msra.mxu0 0.0
        %1178 = vmatprep.subr.mxu0 0.0
        %1179 = vmatpush2.msra.mxu0 0.0
        %1180 = vmatprep.subr.mxu0 0.0
        %1181 = vmatpush2.msra.mxu0 0.0
        %1182 = vmatprep.subr.mxu0 0.0
        %1183 = vmatpush2.msra.mxu0 0.0
        %1184 = vmatprep.subr.mxu0 0.0
        %1185 = vmatpush2.msra.mxu0 0.0
        %1186 = vmatprep.subr.mxu0 0.0
        %1187 = vmatpush2.msra.mxu0 0.0
        %1188 = vmatprep.subr.mxu0 0.0
        %1189 = vmatpush2.msra.mxu0 0.0
        %1190 = vmatprep.subr.mxu0 0.0
        %1191 = vmatpush2.msra.mxu0 0.0
        %1192 = vmatprep.subr.mxu0 0.0
        %1193 = vmatpush2.msra.mxu0 0.0
        %1194 = vmatprep.subr.mxu0 0.0
        %1195 = vmatpush2.msra.mxu0 0.0
        %1196 = vmatprep.subr.mxu0 0.0
        %1197 = vmatpush2.msra.mxu0 0.0
        %1198 = vmatprep.subr.mxu0 0.0
        %1199 = vmatpush2.msra.mxu0 0.0
        %1200 = vmatprep.subr.mxu0 0.0
        %1201 = vmatpush2.msra.mxu0 0.0
        %1202 = vmatprep.mubr.f32.mxu0 0.0
        %1203 = vmatmul.mubr.f32.gmra.mxu0 %v1136
        %v1204 = vpop.f32.mrf.mxu0
        %v1205 = vadd.f32 0.0, %v1204
        %v1206 = vpop.f32.mrf.mxu0
        %1207 = vdwg.mxu0
        %v1209 = vsel %vm1017, %v1060, 0
        %1211 = vmatprep.subr.mxu0 0.0
        %1212 = vmatpush1.msra.mxu0 0.0
        %1213 = vmatprep.subr.mxu0 0.0
        %1214 = vmatpush1.msra.mxu0 0.0
        %1215 = vmatprep.subr.mxu0 0.0
        %1216 = vmatpush1.msra.mxu0 0.0
        %1217 = vmatprep.subr.mxu0 0.0
        %1218 = vmatpush1.msra.mxu0 0.0
        %1219 = vmatprep.subr.mxu0 0.0
        %1220 = vmatpush1.msra.mxu0 0.0
        %1221 = vmatprep.subr.mxu0 0.0
        %1222 = vmatpush1.msra.mxu0 0.0
        %1223 = vmatprep.subr.mxu0 0.0
        %1224 = vmatpush1.msra.mxu0 0.0
        %1225 = vmatprep.subr.mxu0 0.0
        %1226 = vmatpush1.msra.mxu0 0.0
        %1227 = vmatprep.subr.mxu0 0.0
        %1228 = vmatpush1.msra.mxu0 0.0
        %1229 = vmatprep.subr.mxu0 0.0
        %1230 = vmatpush1.msra.mxu0 0.0
        %1231 = vmatprep.subr.mxu0 0.0
        %1232 = vmatpush1.msra.mxu0 0.0
        %1233 = vmatprep.subr.mxu0 0.0
        %1234 = vmatpush1.msra.mxu0 0.0
        %1235 = vmatprep.subr.mxu0 0.0
        %1236 = vmatpush1.msra.mxu0 0.0
        %1237 = vmatprep.subr.mxu0 0.0
        %1238 = vmatpush1.msra.mxu0 0.0
        %1239 = vmatprep.subr.mxu0 0.0
        %1240 = vmatpush1.msra.mxu0 %v703
        %1241 = vmatprep.subr.mxu0 0.0
        %1242 = vmatpush1.msra.mxu0 %v701
        %1243 = vmatprep.subr.mxu0 0.0
        %1244 = vmatpush2.msra.mxu0 0.0
        %1245 = vmatprep.subr.mxu0 0.0
        %1246 = vmatpush2.msra.mxu0 0.0
        %1247 = vmatprep.subr.mxu0 0.0
        %1248 = vmatpush2.msra.mxu0 0.0
        %1249 = vmatprep.subr.mxu0 0.0
        %1250 = vmatpush2.msra.mxu0 0.0
        %1251 = vmatprep.subr.mxu0 0.0
        %1252 = vmatpush2.msra.mxu0 0.0
        %1253 = vmatprep.subr.mxu0 0.0
        %1254 = vmatpush2.msra.mxu0 0.0
        %1255 = vmatprep.subr.mxu0 0.0
        %1256 = vmatpush2.msra.mxu0 0.0
        %1257 = vmatprep.subr.mxu0 0.0
        %1258 = vmatpush2.msra.mxu0 0.0
        %1259 = vmatprep.subr.mxu0 0.0
        %1260 = vmatpush2.msra.mxu0 0.0
        %1261 = vmatprep.subr.mxu0 0.0
        %1262 = vmatpush2.msra.mxu0 0.0
        %1263 = vmatprep.subr.mxu0 0.0
        %1264 = vmatpush2.msra.mxu0 0.0
        %1265 = vmatprep.subr.mxu0 0.0
        %1266 = vmatpush2.msra.mxu0 0.0
        %1267 = vmatprep.subr.mxu0 0.0
        %1268 = vmatpush2.msra.mxu0 0.0
        %1269 = vmatprep.subr.mxu0 0.0
        %1270 = vmatpush2.msra.mxu0 0.0
        %1271 = vmatprep.subr.mxu0 0.0
        %1272 = vmatpush2.msra.mxu0 0.0
        %1273 = vmatprep.subr.mxu0 0.0
        %1274 = vmatpush2.msra.mxu0 0.0
        %1275 = vmatprep.mubr.f32.mxu0 0.0
        %1276 = vmatmul.mubr.f32.gmra.mxu0 %v1209
        %v1277 = vpop.f32.mrf.mxu0
        %v1278 = vadd.f32 0.0, %v1277
        %v1279 = vpop.f32.mrf.mxu0
        %1280 = vdwg.mxu0
        %v1282 = vsel %vm1017, %v1061, 0
        %1284 = vmatprep.subr.mxu0 0.0
        %1285 = vmatpush1.msra.mxu0 0.0
        %1286 = vmatprep.subr.mxu0 0.0
        %1287 = vmatpush1.msra.mxu0 0.0
        %1288 = vmatprep.subr.mxu0 0.0
        %1289 = vmatpush1.msra.mxu0 0.0
        %1290 = vmatprep.subr.mxu0 0.0
        %1291 = vmatpush1.msra.mxu0 0.0
        %1292 = vmatprep.subr.mxu0 0.0
        %1293 = vmatpush1.msra.mxu0 0.0
        %1294 = vmatprep.subr.mxu0 0.0
        %1295 = vmatpush1.msra.mxu0 0.0
        %1296 = vmatprep.subr.mxu0 0.0
        %1297 = vmatpush1.msra.mxu0 0.0
        %1298 = vmatprep.subr.mxu0 0.0
        %1299 = vmatpush1.msra.mxu0 0.0
        %1300 = vmatprep.subr.mxu0 0.0
        %1301 = vmatpush1.msra.mxu0 0.0
        %1302 = vmatprep.subr.mxu0 0.0
        %1303 = vmatpush1.msra.mxu0 0.0
        %1304 = vmatprep.subr.mxu0 0.0
        %1305 = vmatpush1.msra.mxu0 0.0
        %1306 = vmatprep.subr.mxu0 0.0
        %1307 = vmatpush1.msra.mxu0 0.0
        %1308 = vmatprep.subr.mxu0 0.0
        %1309 = vmatpush1.msra.mxu0 0.0
        %1310 = vmatprep.subr.mxu0 0.0
        %1311 = vmatpush1.msra.mxu0 0.0
        %1312 = vmatprep.subr.mxu0 0.0
        %1313 = vmatpush1.msra.mxu0 %v709
        %1314 = vmatprep.subr.mxu0 0.0
        %1315 = vmatpush1.msra.mxu0 %v707
        %1316 = vmatprep.subr.mxu0 0.0
        %1317 = vmatpush2.msra.mxu0 0.0
        %1318 = vmatprep.subr.mxu0 0.0
        %1319 = vmatpush2.msra.mxu0 0.0
        %1320 = vmatprep.subr.mxu0 0.0
        %1321 = vmatpush2.msra.mxu0 0.0
        %1322 = vmatprep.subr.mxu0 0.0
        %1323 = vmatpush2.msra.mxu0 0.0
        %1324 = vmatprep.subr.mxu0 0.0
        %1325 = vmatpush2.msra.mxu0 0.0
        %1326 = vmatprep.subr.mxu0 0.0
        %1327 = vmatpush2.msra.mxu0 0.0
        %1328 = vmatprep.subr.mxu0 0.0
        %1329 = vmatpush2.msra.mxu0 0.0
        %1330 = vmatprep.subr.mxu0 0.0
        %1331 = vmatpush2.msra.mxu0 0.0
        %1332 = vmatprep.subr.mxu0 0.0
        %1333 = vmatpush2.msra.mxu0 0.0
        %1334 = vmatprep.subr.mxu0 0.0
        %1335 = vmatpush2.msra.mxu0 0.0
        %1336 = vmatprep.subr.mxu0 0.0
        %1337 = vmatpush2.msra.mxu0 0.0
        %1338 = vmatprep.subr.mxu0 0.0
        %1339 = vmatpush2.msra.mxu0 0.0
        %1340 = vmatprep.subr.mxu0 0.0
        %1341 = vmatpush2.msra.mxu0 0.0
        %1342 = vmatprep.subr.mxu0 0.0
        %1343 = vmatpush2.msra.mxu0 0.0
        %1344 = vmatprep.subr.mxu0 0.0
        %1345 = vmatpush2.msra.mxu0 0.0
        %1346 = vmatprep.subr.mxu0 0.0
        %1347 = vmatpush2.msra.mxu0 0.0
        %1348 = vmatprep.mubr.f32.mxu0 0.0
        %1349 = vmatmul.mubr.f32.gmra.mxu0 %v1282
        %v1350 = vpop.f32.mrf.mxu0
        %v1351 = vadd.f32 0.0, %v1350
        %v1352 = vpop.f32.mrf.mxu0
        %1353 = vdwg.mxu0
        %1355 = vrot.lane.b32.xlu0 %v1205, 8
        %v1356 = vpop.permute.xlu0 %1355
        %1359 = vrot.lane.b32.xlu0 %v1278, 16
        %v1360 = vpop.permute.xlu0 %1359
        %1363 = vrot.lane.b32.xlu0 %v1351, 24
        %v1364 = vpop.permute.xlu0 %1363
        %v1366 = vsel %vm712, %v1132, %v1356
        %v1367 = vsel %vm1017, %v1366, %v1360
        %vm1368 = vcmask 195584
        %v1369 = vsel %vm1368, %v1367, %v1364
        %v1370 = vlaneseq
        %v1371 = vshrl.u32 %v1370, 7
        %v1372 = vsub.s32 4, %v1371
        %v1373 = vrot.slane %v323, %v1372
        %v1375 = vsel %vm340, %v1369, 0
        %1377 = vmatprep.subr.mxu0 0.0
        %1378 = vmatpush1.msra.mxu0 0.0
        %1379 = vmatprep.subr.mxu0 0.0
        %1380 = vmatpush1.msra.mxu0 0.0
        %1381 = vmatprep.subr.mxu0 0.0
        %1382 = vmatpush1.msra.mxu0 0.0
        %1383 = vmatprep.subr.mxu0 0.0
        %1384 = vmatpush1.msra.mxu0 0.0
        %1385 = vmatprep.subr.mxu0 0.0
        %1386 = vmatpush1.msra.mxu0 0.0
        %1387 = vmatprep.subr.mxu0 0.0
        %1388 = vmatpush1.msra.mxu0 0.0
        %1389 = vmatprep.subr.mxu0 0.0
        %1390 = vmatpush1.msra.mxu0 0.0
        %1391 = vmatprep.subr.mxu0 0.0
        %1392 = vmatpush1.msra.mxu0 0.0
        %1393 = vmatprep.subr.mxu0 0.0
        %1394 = vmatpush1.msra.mxu0 0.0
        %1395 = vmatprep.subr.mxu0 0.0
        %1396 = vmatpush1.msra.mxu0 0.0
        %1397 = vmatprep.subr.mxu0 0.0
        %1398 = vmatpush1.msra.mxu0 0.0
        %1399 = vmatprep.subr.mxu0 0.0
        %1400 = vmatpush1.msra.mxu0 0.0
        %1401 = vmatprep.subr.mxu0 0.0
        %1402 = vmatpush1.msra.mxu0 %v339
        %1403 = vmatprep.subr.mxu0 0.0
        %1404 = vmatpush1.msra.mxu0 %v338
        %1405 = vmatprep.subr.mxu0 0.0
        %1406 = vmatpush1.msra.mxu0 %v337
        %1407 = vmatprep.subr.mxu0 0.0
        %1408 = vmatpush1.msra.mxu0 %v336
        %1409 = vmatprep.subr.mxu0 0.0
        %1410 = vmatpush2.msra.mxu0 0.0
        %1411 = vmatprep.subr.mxu0 0.0
        %1412 = vmatpush2.msra.mxu0 0.0
        %1413 = vmatprep.subr.mxu0 0.0
        %1414 = vmatpush2.msra.mxu0 0.0
        %1415 = vmatprep.subr.mxu0 0.0
        %1416 = vmatpush2.msra.mxu0 0.0
        %1417 = vmatprep.subr.mxu0 0.0
        %1418 = vmatpush2.msra.mxu0 0.0
        %1419 = vmatprep.subr.mxu0 0.0
        %1420 = vmatpush2.msra.mxu0 0.0
        %1421 = vmatprep.subr.mxu0 0.0
        %1422 = vmatpush2.msra.mxu0 0.0
        %1423 = vmatprep.subr.mxu0 0.0
        %1424 = vmatpush2.msra.mxu0 0.0
        %1425 = vmatprep.subr.mxu0 0.0
        %1426 = vmatpush2.msra.mxu0 0.0
        %1427 = vmatprep.subr.mxu0 0.0
        %1428 = vmatpush2.msra.mxu0 0.0
        %1429 = vmatprep.subr.mxu0 0.0
        %1430 = vmatpush2.msra.mxu0 0.0
        %1431 = vmatprep.subr.mxu0 0.0
        %1432 = vmatpush2.msra.mxu0 0.0
        %1433 = vmatprep.subr.mxu0 0.0
        %1434 = vmatpush2.msra.mxu0 0.0
        %1435 = vmatprep.subr.mxu0 0.0
        %1436 = vmatpush2.msra.mxu0 0.0
        %1437 = vmatprep.subr.mxu0 0.0
        %1438 = vmatpush2.msra.mxu0 0.0
        %1439 = vmatprep.subr.mxu0 0.0
        %1440 = vmatpush2.msra.mxu0 0.0
        %1441 = vmatprep.mubr.f32.mxu0 0.0
        %1442 = vmatmul.mubr.f32.gmra.mxu0 %v1375
        %v1443 = vpop.f32.mrf.mxu0
        %v1444 = vadd.f32 %v1373, %v1443
        %v1445 = vpop.f32.mrf.mxu0
        %1446 = vdwg.mxu0
        %v1447 = vadd.f32 %v318, %v1444
        %v1448 = vsel %vm340, %v1447, 0.0
        %1449 = vadd.xlane.f32.xlu0 %v1448
        %v1450 = vpop.xlane.xlu0 %1449
        %v1451 = vmul.f32 %v1450, %v344
        %v1452 = vsub.f32 %v1447, %v1451
        %v1453 = vmul.f32 %v1452, %v1452
        %v1454 = vsel %vm340, %v1453, 0.0
        %1455 = vadd.xlane.f32.xlu0 %v1454
        %v1456 = vpop.xlane.xlu0 %1455
        %v1457 = vmul.f32 %v1456, %v344
        %v1458 = vadd.f32 %v1457, 1e-05
        %v1459 = vrsqrt.pop %v1458
        %v1460 = vmul.f32 %v1452, %v1459
        %v1461 = vlaneseq
        %v1462 = vshrl.u32 %v1461, 7
        %v1463 = vsub.s32 2, %v1462
        %v1464 = vrot.slane %v323, %v1463
        %v1465 = vmul.f32 %v1460, %v1464
        %v1466 = vlaneseq
        %v1467 = vshrl.u32 %v1466, 7
        %v1468 = vsub.s32 3, %v1467
        %v1469 = vrot.slane %v323, %v1468
        %v1470 = vadd.f32 %v1465, %v1469
        %v1471 = vld [vmem:[%s5] sm:$0xff]
        %v1472 = vld [vmem:[%s5 + $0x8] sm:$0xff]
        %v1473 = vld [vmem:[%s5 + $0x10] sm:$0xff]
        %v1474 = vld [vmem:[%s5 + $0x18] sm:$0xff]
        %v1475 = vlaneseq
        %v1476 = vshrl.u32 %v1475, 7
        %v1477 = vsub.s32 7, %v1476
        %v1478 = vrot.slane %v323, %v1477
        %v1480 = vsel %vm340, %v1470, 0
        %1482 = vmatprep.subr.mxu0 0.0
        %1483 = vmatpush1.msra.mxu0 0.0
        %1484 = vmatprep.subr.mxu0 0.0
        %1485 = vmatpush1.msra.mxu0 0.0
        %1486 = vmatprep.subr.mxu0 0.0
        %1487 = vmatpush1.msra.mxu0 0.0
        %1488 = vmatprep.subr.mxu0 0.0
        %1489 = vmatpush1.msra.mxu0 0.0
        %1490 = vmatprep.subr.mxu0 0.0
        %1491 = vmatpush1.msra.mxu0 0.0
        %1492 = vmatprep.subr.mxu0 0.0
        %1493 = vmatpush1.msra.mxu0 0.0
        %1494 = vmatprep.subr.mxu0 0.0
        %1495 = vmatpush1.msra.mxu0 0.0
        %1496 = vmatprep.subr.mxu0 0.0
        %1497 = vmatpush1.msra.mxu0 0.0
        %1498 = vmatprep.subr.mxu0 0.0
        %1499 = vmatpush1.msra.mxu0 0.0
        %1500 = vmatprep.subr.mxu0 0.0
        %1501 = vmatpush1.msra.mxu0 0.0
        %1502 = vmatprep.subr.mxu0 0.0
        %1503 = vmatpush1.msra.mxu0 0.0
        %1504 = vmatprep.subr.mxu0 0.0
        %1505 = vmatpush1.msra.mxu0 0.0
        %1506 = vmatprep.subr.mxu0 0.0
        %1507 = vmatpush1.msra.mxu0 %v1474
        %1508 = vmatprep.subr.mxu0 0.0
        %1509 = vmatpush1.msra.mxu0 %v1473
        %1510 = vmatprep.subr.mxu0 0.0
        %1511 = vmatpush1.msra.mxu0 %v1472
        %1512 = vmatprep.subr.mxu0 0.0
        %1513 = vmatpush1.msra.mxu0 %v1471
        %1514 = vmatprep.subr.mxu0 0.0
        %1515 = vmatpush2.msra.mxu0 0.0
        %1516 = vmatprep.subr.mxu0 0.0
        %1517 = vmatpush2.msra.mxu0 0.0
        %1518 = vmatprep.subr.mxu0 0.0
        %1519 = vmatpush2.msra.mxu0 0.0
        %1520 = vmatprep.subr.mxu0 0.0
        %1521 = vmatpush2.msra.mxu0 0.0
        %1522 = vmatprep.subr.mxu0 0.0
        %1523 = vmatpush2.msra.mxu0 0.0
        %1524 = vmatprep.subr.mxu0 0.0
        %1525 = vmatpush2.msra.mxu0 0.0
        %1526 = vmatprep.subr.mxu0 0.0
        %1527 = vmatpush2.msra.mxu0 0.0
        %1528 = vmatprep.subr.mxu0 0.0
        %1529 = vmatpush2.msra.mxu0 0.0
        %1530 = vmatprep.subr.mxu0 0.0
        %1531 = vmatpush2.msra.mxu0 0.0
        %1532 = vmatprep.subr.mxu0 0.0
        %1533 = vmatpush2.msra.mxu0 0.0
        %1534 = vmatprep.subr.mxu0 0.0
        %1535 = vmatpush2.msra.mxu0 0.0
        %1536 = vmatprep.subr.mxu0 0.0
        %1537 = vmatpush2.msra.mxu0 0.0
        %1538 = vmatprep.subr.mxu0 0.0
        %1539 = vmatpush2.msra.mxu0 0.0
        %1540 = vmatprep.subr.mxu0 0.0
        %1541 = vmatpush2.msra.mxu0 0.0
        %1542 = vmatprep.subr.mxu0 0.0
        %1543 = vmatpush2.msra.mxu0 0.0
        %1544 = vmatprep.subr.mxu0 0.0
        %1545 = vmatpush2.msra.mxu0 0.0
        %1546 = vmatprep.mubr.f32.mxu0 0.0
        %1547 = vmatmul.mubr.f32.gmra.mxu0 %v1480
        %v1548 = vpop.f32.mrf.mxu0
        %v1549 = vadd.f32 %v1478, %v1548
        %v1550 = vpop.f32.mrf.mxu0
        %1551 = vdwg.mxu0
        %v1552 = vmul.f32 %v1549, 0.5
        %v1553 = vmul.f32 %v1549, 0.70710677
        %v1554 = verf.f32.pop %v1553
        %v1555 = vadd.f32 %v1554, 1.0
        %v1556 = vmul.f32 %v1552, %v1555
        %v1557 = vld [vmem:[%s6] sm:$0xff]
        %v1558 = vld [vmem:[%s6 + $0x8] sm:$0xff]
        %v1559 = vld [vmem:[%s6 + $0x10] sm:$0xff]
        %v1560 = vld [vmem:[%s6 + $0x18] sm:$0xff]
        %v1561 = vld [vmem:[%s6 + $0x20] sm:$0xff]
        %v1562 = vld [vmem:[%s6 + $0x28] sm:$0xff]
        %v1563 = vld [vmem:[%s6 + $0x30] sm:$0xff]
        %v1564 = vld [vmem:[%s6 + $0x38] sm:$0xff]
        %v1565 = vld [vmem:[%s6 + $0x40] sm:$0xff]
        %v1566 = vld [vmem:[%s6 + $0x48] sm:$0xff]
        %v1567 = vld [vmem:[%s6 + $0x50] sm:$0xff]
        %v1568 = vld [vmem:[%s6 + $0x58] sm:$0xff]
        %v1569 = vld [vmem:[%s6 + $0x60] sm:$0xff]
        %v1570 = vld [vmem:[%s6 + $0x68] sm:$0xff]
        %v1571 = vld [vmem:[%s6 + $0x70] sm:$0xff]
        %v1572 = vld [vmem:[%s6 + $0x78] sm:$0xff]
        %v1573 = vlaneseq
        %v1574 = vshrl.u32 %v1573, 7
        %v1575 = vsub.s32 5, %v1574
        %v1576 = vrot.slane %v323, %v1575
        %1577 = vmatprep.subr.mxu0 0.0
        %1578 = vmatpush1.msra.mxu0 %v1572
        %1579 = vmatprep.subr.mxu0 0.0
        %1580 = vmatpush1.msra.mxu0 %v1571
        %1581 = vmatprep.subr.mxu0 0.0
        %1582 = vmatpush1.msra.mxu0 %v1570
        %1583 = vmatprep.subr.mxu0 0.0
        %1584 = vmatpush1.msra.mxu0 %v1569
        %1585 = vmatprep.subr.mxu0 0.0
        %1586 = vmatpush1.msra.mxu0 %v1568
        %1587 = vmatprep.subr.mxu0 0.0
        %1588 = vmatpush1.msra.mxu0 %v1567
        %1589 = vmatprep.subr.mxu0 0.0
        %1590 = vmatpush1.msra.mxu0 %v1566
        %1591 = vmatprep.subr.mxu0 0.0
        %1592 = vmatpush1.msra.mxu0 %v1565
        %1593 = vmatprep.subr.mxu0 0.0
        %1594 = vmatpush1.msra.mxu0 %v1564
        %1595 = vmatprep.subr.mxu0 0.0
        %1596 = vmatpush1.msra.mxu0 %v1563
        %1597 = vmatprep.subr.mxu0 0.0
        %1598 = vmatpush1.msra.mxu0 %v1562
        %1599 = vmatprep.subr.mxu0 0.0
        %1600 = vmatpush1.msra.mxu0 %v1561
        %1601 = vmatprep.subr.mxu0 0.0
        %1602 = vmatpush1.msra.mxu0 %v1560
        %1603 = vmatprep.subr.mxu0 0.0
        %1604 = vmatpush1.msra.mxu0 %v1559
        %1605 = vmatprep.subr.mxu0 0.0
        %1606 = vmatpush1.msra.mxu0 %v1558
        %1607 = vmatprep.subr.mxu0 0.0
        %1608 = vmatpush1.msra.mxu0 %v1557
        %1609 = vmatprep.subr.mxu0 0.0
        %1610 = vmatpush2.msra.mxu0 0.0
        %1611 = vmatprep.subr.mxu0 0.0
        %1612 = vmatpush2.msra.mxu0 0.0
        %1613 = vmatprep.subr.mxu0 0.0
        %1614 = vmatpush2.msra.mxu0 0.0
        %1615 = vmatprep.subr.mxu0 0.0
        %1616 = vmatpush2.msra.mxu0 0.0
        %1617 = vmatprep.subr.mxu0 0.0
        %1618 = vmatpush2.msra.mxu0 0.0
        %1619 = vmatprep.subr.mxu0 0.0
        %1620 = vmatpush2.msra.mxu0 0.0
        %1621 = vmatprep.subr.mxu0 0.0
        %1622 = vmatpush2.msra.mxu0 0.0
        %1623 = vmatprep.subr.mxu0 0.0
        %1624 = vmatpush2.msra.mxu0 0.0
        %1625 = vmatprep.subr.mxu0 0.0
        %1626 = vmatpush2.msra.mxu0 0.0
        %1627 = vmatprep.subr.mxu0 0.0
        %1628 = vmatpush2.msra.mxu0 0.0
        %1629 = vmatprep.subr.mxu0 0.0
        %1630 = vmatpush2.msra.mxu0 0.0
        %1631 = vmatprep.subr.mxu0 0.0
        %1632 = vmatpush2.msra.mxu0 0.0
        %1633 = vmatprep.subr.mxu0 0.0
        %1634 = vmatpush2.msra.mxu0 0.0
        %1635 = vmatprep.subr.mxu0 0.0
        %1636 = vmatpush2.msra.mxu0 0.0
        %1637 = vmatprep.subr.mxu0 0.0
        %1638 = vmatpush2.msra.mxu0 0.0
        %1639 = vmatprep.subr.mxu0 0.0
        %1640 = vmatpush2.msra.mxu0 0.0
        %1641 = vmatprep.mubr.f32.mxu0 0.0
        %1642 = vmatmul.mubr.f32.gmra.mxu0 %v1556
        %v1643 = vpop.f32.mrf.mxu0
        %v1644 = vadd.f32 %v1576, %v1643
        %v1645 = vpop.f32.mrf.mxu0
        %1646 = vdwg.mxu0
        %v1647 = vadd.f32 %v1447, %v1644
        %1648 = vst.msk [vmem:[%s301] sm:$0xff] %vm340, %v1647
        %s1649 = sand.u32 %s191, 1
        %s1650 = scalar_lea.sflag [#allocation3], %s1649
        %s1651 = sand.u32 %s191, 1
        %s1652 = smul.addr %s1651, 8
        %s1653 = scalar_lea.vmem [#allocation2], %s1652
        // Predicated region
        $region49: #{tpu_custom_call.1} parent=47 // pred_check
          %p1654 = pneg %p201
        $region50: #{tpu_custom_call.1} parent=47 // pred_check_branch
          %1656 = sbr.rel (%p1654) target = $region52
        $region51: #{tpu_custom_call.1} parent=47 // pred_region
          %s1658 = ssub.s32 128, 128
          %1659 = vsyncadd %s1650, %s1658
          %s1660 = smul.addr %s21, 128
          %s1661 = scalar_lea.hbm %s7, %s1660
          %s1663 = sshll.u32 %s1653, 4
          %s1664 = int_to_ptr.vmem [resolvable:$true] %s1663
          %1666 = dma.vmem_to_hbm [thread:$0]  %s1664, 128, %s1661, %s1650
        $region52: #{tpu_custom_call.1} parent=47 // pred_fallthru
          _
      $region48: #{tpu_custom_call.1} parent=5 // pred_fallthru
        _
      %p1667 = scmp.le.s32.totalorder 2, %s16
      // Predicated region
      $region53: #{tpu_custom_call.1} parent=5 // pred_check
        %p1668 = pneg %p1667
      $region54: #{tpu_custom_call.1} parent=5 // pred_check_branch
        %1670 = sbr.rel (%p1668) target = $region56
      $region55: #{tpu_custom_call.1} parent=5 // pred_region
        %s1671 = ssub.s32 %s16, 2
        // Predicated region
        $region57: #{tpu_custom_call.1} parent=55 // pred_check
          %p1672 = pneg %p207
        $region58: #{tpu_custom_call.1} parent=55 // pred_check_branch
          %1674 = sbr.rel (%p1672) target = $region60
        $region59: #{tpu_custom_call.1} parent=55 // pred_region
          %s1675 = sand.u32 %s192, 1
          %s1676 = scalar_lea.sflag [#allocation3], %s1675
          %s1677 = sand.u32 %s192, 1
          %s1678 = smul.addr %s1677, 8
          %s1679 = scalar_lea.vmem [#allocation2], %s1678
          %1680 = dma.done %s1676, 128
        $region60: #{tpu_custom_call.1} parent=55 // pred_fallthru
          _
      $region56: #{tpu_custom_call.1} parent=5 // pred_fallthru
        _
    $region6: #{tpu_custom_call.1} parent=1 // loop_footer
      %s20 = sadd.s32 1, %s16
    $region7: #{tpu_custom_call.1} parent=1 // loop_footer_branch
      %15 = sbr.rel target = $region3
    $region8: #{tpu_custom_call.1} parent=1 // loop_exit
      _
    %1681 = vsyncpa [#allocation3], 1
    %s1682 = scalar_lea.sflag [#allocation3], 1
    %1683 = vsyncpa %s1682, 1

</llo_original>
